<compile_context>
chip_gen: v7x
topology: tpu7x:2x2x1
jax: 0.10.0
libtpu: 0.0.40
codegen_flags: <defaults>
</compile_context>

<pallas_src>
import functools

import jax
import jax.numpy as jnp
from jax.experimental import pallas as pl
from jax.experimental.pallas import tpu as pltpu


def policy_net_kernel(x_ref, w1_ref, b1_ref, w2_ref, b2_ref, o_ref):
    # fc1 + ReLU (f32 accumulate on the MXU)
    x = x_ref[...]
    h = jnp.dot(x, w1_ref[...], preferred_element_type=jnp.float32) + b1_ref[...]
    h = jnp.maximum(h, 0.0)
    # fc2: class dim pre-padded to a lane-dense width (128); padded columns
    # carry a -1e30 bias so exp(padded logit) == 0 under softmax.
    logits = jnp.dot(h, w2_ref[...], preferred_element_type=jnp.float32) + b2_ref[...]
    # Numerically stable softmax over the last (lane) dim.
    m = jnp.max(logits, axis=-1, keepdims=True)
    e = jnp.exp(logits - m)
    denom = jnp.sum(e, axis=-1, keepdims=True)
    # Approx reciprocal on the (otherwise idle) EUP + one Newton refinement so
    # rows sum to 1 within ~1e-7.
    inv = pl.reciprocal(denom, approx=True)
    inv = inv * (2.0 - denom * inv)
    o_ref[...] = (e * inv).astype(o_ref.dtype)


def prepare_params(w1, b1, w2, b2):
    """One-time parameter prep (hoisted out of the per-call hot path).

    Pads the class dim of w2/b2 to a lane-dense multiple of 128: zero weight
    columns + -1e30 bias so padded classes vanish under softmax.
    w1: (in, hidden), b1: (hidden,) or (1, hidden),
    w2: (hidden, out), b2: (out,) or (1, out).
    """
    hidden, out_size = w2.shape
    out_pad = max(128, pl.cdiv(out_size, 128) * 128)
    w2p = jnp.zeros((hidden, out_pad), w2.dtype).at[:, :out_size].set(w2)
    b2p = jnp.full((1, out_pad), -1e30, b2.dtype).at[:, :out_size].set(
        jnp.reshape(b2, (1, out_size)))
    b1 = jnp.reshape(b1, (1, -1))
    return w1, b1, w2p, b2p, out_size


def _tensorcores_per_chip():
    """2 on v7x (megacore-style dual TC), else 1. Conservative fallback: 1."""
    try:
        kind = jax.devices()[0].device_kind.lower()
    except Exception:
        return 1
    return 2 if ("v7" in kind or "tpu7" in kind) else 1


def _select_tb(batch, requested_tb, num_cores, max_tb=2048):
    """Adaptive batch tile (sublane-aligned)."""
    b8 = max(8, ((batch + 7) // 8) * 8)
    if requested_tb is not None:
        return min(max(8, (requested_tb // 8) * 8), b8)
    if num_cores <= 1:
        # Single TC (v5e/v6e): one grid step if the whole batch fits; the
        # weights are VMEM-resident so extra steps only add ~0.35 us each.
        return b8 if b8 <= max_tb else max_tb
    # v7x: want >=4 steps (2 per TC) so both TCs get work and each can
    # double-buffer the x/out DMA against compute.
    if b8 <= 32:
        return b8
    tb = ((pl.cdiv(b8, 4)) + 7) // 8 * 8
    return min(max(tb, 8), max_tb)


def policy_network(x, w1, b1, w2p, b2p, out_size, *, tb=None,
                   out_dtype=jnp.float32):
    """Forward pass with pre-padded params (see prepare_params).

    x: (B, input_size). Returns (B, out_size) softmax probabilities.
    Call inside jax.jit so the final un-padding slice fuses with the consumer.
    """
    B, in_size = x.shape
    hidden = w1.shape[1]
    out_pad = w2p.shape[1]

    num_cores = _tensorcores_per_chip()
    tb = _select_tb(B, tb, num_cores)
    b_pad = pl.cdiv(B, tb) * tb
    xp = x if b_pad == B else jnp.zeros((b_pad, in_size), x.dtype).at[:B].set(x)
    n_tiles = b_pad // tb

    probs = pl.pallas_call(
        policy_net_kernel,
        out_shape=jax.ShapeDtypeStruct((b_pad, out_pad), out_dtype),
        grid=(n_tiles,),
        in_specs=[
            pl.BlockSpec((tb, in_size), lambda i: (i, 0)),        # x: tiled over batch
            pl.BlockSpec((in_size, hidden), lambda i: (0, 0)),    # w1: VMEM-resident
            pl.BlockSpec((1, hidden), lambda i: (0, 0)),          # b1: VMEM-resident
            pl.BlockSpec((hidden, out_pad), lambda i: (0, 0)),    # w2 (padded): resident
            pl.BlockSpec((1, out_pad), lambda i: (0, 0)),         # b2 (padded): resident
        ],
        out_specs=pl.BlockSpec((tb, out_pad), lambda i: (i, 0)),
        compiler_params=pltpu.CompilerParams(
            dimension_semantics=("parallel",),      # shard batch tiles across v7x's 2 TCs
            vmem_limit_bytes=32 * 1024 * 1024,      # explicit; safe on v5e/v6e/v7x
        ),
    )(xp, w1, b1, w2p, b2p)

    # Strip batch and class padding. Inside jit this fuses with the next op
    # instead of materializing an HBM->HBM copy.
    return probs[:B, :out_size]


def reference(x, w1, b1, w2, b2):
    h = jnp.maximum(x @ w1 + b1, 0.0)
    logits = h @ w2 + b2
    return jax.nn.softmax(logits, axis=-1)


if __name__ == "__main__":
    key = jax.random.PRNGKey(0)
    # Feature sizes match the module spec (input=16, hidden=32, output=8);
    # batch 512 exercises the tiling path (1 step on v5e/v6e, 4 on v7x).
    batch, input_size, hidden_size, output_size = 512, 16, 32, 8

    k = jax.random.split(key, 5)
    x = jax.random.normal(k[0], (batch, input_size), dtype=jnp.float32)
    # Deterministic "nn.Linear"-style init (uniform in +-1/sqrt(fan_in)),
    # stored pre-transposed as (in_features, out_features).
    bound1 = 1.0 / (input_size ** 0.5)
    w1 = jax.random.uniform(k[1], (input_size, hidden_size), jnp.float32, -bound1, bound1)
    b1 = jax.random.uniform(k[2], (1, hidden_size), jnp.float32, -bound1, bound1)
    bound2 = 1.0 / (hidden_size ** 0.5)
    w2 = jax.random.uniform(k[3], (hidden_size, output_size), jnp.float32, -bound2, bound2)
    b2 = jax.random.uniform(k[4], (1, output_size), jnp.float32, -bound2, bound2)

    # One-time parameter prep (padding hoisted out of the per-call path).
    w1_p, b1_p, w2p, b2p, out_sz = prepare_params(w1, b1, w2, b2)

    fwd = jax.jit(functools.partial(policy_network, w1=w1_p, b1=b1_p,
                                    w2p=w2p, b2p=b2p, out_size=out_sz))

    out = jax.block_until_ready(fwd(x))
    ref = reference(x, w1, b1, w2, b2)
    assert out.shape == (batch, output_size)
    assert jnp.allclose(out, ref, atol=1e-5, rtol=1e-5)
    assert jnp.allclose(jnp.sum(out, axis=-1), 1.0, atol=1e-5)

    # Also exercise the small / ragged-batch path (B not a multiple of 8).
    xs = x[:5]
    out_s = jax.block_until_ready(fwd(xs))
    assert out_s.shape == (5, output_size)
    assert jnp.allclose(out_s, reference(xs, w1, b1, w2, b2), atol=1e-5, rtol=1e-5)

    print("KERNEL_OK")
</pallas_src>

<mosaic_0001>
module attributes {stable_mosaic.version = 11 : i64} {
  func.func @policy_net_kernel(%arg0: i32, %arg1: memref<512x16xf32, #tpu.memory_space<vmem>>, %arg2: memref<16x32xf32, #tpu.memory_space<vmem>>, %arg3: memref<1x32xf32, #tpu.memory_space<vmem>>, %arg4: memref<32x128xf32, #tpu.memory_space<vmem>>, %arg5: memref<1x128xf32, #tpu.memory_space<vmem>>, %arg6: memref<512x128xf32, #tpu.memory_space<vmem>>) attributes {dimension_semantics = [#tpu.dimension_semantics<parallel>], iteration_bounds = array<i64: 1>, scalar_prefetch = 0 : i64, scratch_operands = 0 : i64, tpu.core_type = #tpu.core_type<tc>, window_params = [{transform_indices = @transform_0, window_bounds = array<i64: 512, 16>}, {pipeline_mode = #tpu.pipeline_mode<synchronous>, transform_indices = @transform_1, window_bounds = array<i64: 16, 32>}, {pipeline_mode = #tpu.pipeline_mode<synchronous>, transform_indices = @transform_2, window_bounds = array<i64: 1, 32>}, {pipeline_mode = #tpu.pipeline_mode<synchronous>, transform_indices = @transform_3, window_bounds = array<i64: 32, 128>}, {pipeline_mode = #tpu.pipeline_mode<synchronous>, transform_indices = @transform_4, window_bounds = array<i64: 1, 128>}, {transform_indices = @transform_5, window_bounds = array<i64: 512, 128>}]} {
    %c0 = arith.constant 0 : index
    %c0_0 = arith.constant 0 : index
    %0 = vector.load %arg1[%c0, %c0_0] : memref<512x16xf32, #tpu.memory_space<vmem>>, vector<512x16xf32>
    %c0_1 = arith.constant 0 : index
    %c0_2 = arith.constant 0 : index
    %1 = vector.load %arg2[%c0_1, %c0_2] : memref<16x32xf32, #tpu.memory_space<vmem>>, vector<16x32xf32>
    %cst = arith.constant dense<0.000000e+00> : vector<512x32xf32>
    %2 = tpu.matmul %0, %1, %cst {dimension_numbers = #tpu.dot_dimension_numbers<[1], [0], [0], [1], [0, 0, 1, 1], [], []>} : vector<512x16xf32>, vector<16x32xf32>, vector<512x32xf32> -> vector<512x32xf32>
    %c0_3 = arith.constant 0 : index
    %c0_4 = arith.constant 0 : index
    %3 = vector.load %arg3[%c0_3, %c0_4] : memref<1x32xf32, #tpu.memory_space<vmem>>, vector<1x32xf32>
    %4 = vector.broadcast %3 : vector<1x32xf32> to vector<512x32xf32>
    %5 = arith.addf %2, %4 : vector<512x32xf32>
    %cst_5 = arith.constant 0.000000e+00 : f32
    %6 = vector.broadcast %cst_5 : f32 to vector<512x32xf32>
    %7 = arith.maximumf %5, %6 : vector<512x32xf32>
    %c0_6 = arith.constant 0 : index
    %c0_7 = arith.constant 0 : index
    %8 = vector.load %arg4[%c0_6, %c0_7] : memref<32x128xf32, #tpu.memory_space<vmem>>, vector<32x128xf32>
    %cst_8 = arith.constant dense<0.000000e+00> : vector<512x128xf32>
    %9 = tpu.matmul %7, %8, %cst_8 {dimension_numbers = #tpu.dot_dimension_numbers<[1], [0], [0], [1], [0, 0, 1, 1], [], []>} : vector<512x32xf32>, vector<32x128xf32>, vector<512x128xf32> -> vector<512x128xf32>
    %c0_9 = arith.constant 0 : index
    %c0_10 = arith.constant 0 : index
    %10 = vector.load %arg5[%c0_9, %c0_10] : memref<1x128xf32, #tpu.memory_space<vmem>>, vector<1x128xf32>
    %11 = vector.broadcast %10 : vector<1x128xf32> to vector<512x128xf32>
    %12 = arith.addf %9, %11 : vector<512x128xf32>
    %cst_11 = arith.constant dense<0xFF800000> : vector<512xf32>
    %13 = vector.multi_reduction <maximumf>, %12, %cst_11 [1] : vector<512x128xf32> to vector<512xf32>
    %14 = vector.shape_cast %13 : vector<512xf32> to vector<512x1xf32>
    %15 = vector.broadcast %14 : vector<512x1xf32> to vector<512x128xf32>
    %16 = arith.subf %12, %15 : vector<512x128xf32>
    %17 = math.exp %16 : vector<512x128xf32>
    %cst_12 = arith.constant dense<0.000000e+00> : vector<512xf32>
    %18 = vector.multi_reduction <add>, %17, %cst_12 [1] : vector<512x128xf32> to vector<512xf32>
    %19 = vector.shape_cast %18 : vector<512xf32> to vector<512x1xf32>
    %20 = tpu.reciprocal %19 {approx = true} : vector<512x1xf32> -> vector<512x1xf32>
    %21 = arith.mulf %19, %20 : vector<512x1xf32>
    %cst_13 = arith.constant 2.000000e+00 : f32
    %22 = vector.broadcast %cst_13 : f32 to vector<512x1xf32>
    %23 = arith.subf %22, %21 : vector<512x1xf32>
    %24 = arith.mulf %20, %23 : vector<512x1xf32>
    %25 = vector.broadcast %24 : vector<512x1xf32> to vector<512x128xf32>
    %26 = arith.mulf %17, %25 : vector<512x128xf32>
    %c0_14 = arith.constant 0 : index
    %c0_15 = arith.constant 0 : index
    %27 = vector.load %arg6[%c0_14, %c0_15] : memref<512x128xf32, #tpu.memory_space<vmem>>, vector<512x128xf32>
    tpu.vector_store %arg6[%c0_14, %c0_15], %26 {strides = array<i32>} : memref<512x128xf32, #tpu.memory_space<vmem>>, vector<512x128xf32>,
    return
  }
  func.func @transform_0(%arg0: i32) -> (i32, i32) {
    %c0_i32 = arith.constant 0 : i32
    %c0_i32_0 = arith.constant 0 : i32
    return %arg0, %c0_i32 : i32, i32
  }
  func.func @transform_1(%arg0: i32) -> (i32, i32) {
    %c0_i32 = arith.constant 0 : i32
    %c0_i32_0 = arith.constant 0 : i32
    %c0_i32_1 = arith.constant 0 : i32
    return %c0_i32, %c0_i32_0 : i32, i32
  }
  func.func @transform_2(%arg0: i32) -> (i32, i32) {
    %c0_i32 = arith.constant 0 : i32
    %c0_i32_0 = arith.constant 0 : i32
    %c0_i32_1 = arith.constant 0 : i32
    return %c0_i32, %c0_i32_0 : i32, i32
  }
  func.func @transform_3(%arg0: i32) -> (i32, i32) {
    %c0_i32 = arith.constant 0 : i32
    %c0_i32_0 = arith.constant 0 : i32
    %c0_i32_1 = arith.constant 0 : i32
    return %c0_i32, %c0_i32_0 : i32, i32
  }
  func.func @transform_4(%arg0: i32) -> (i32, i32) {
    %c0_i32 = arith.constant 0 : i32
    %c0_i32_0 = arith.constant 0 : i32
    %c0_i32_1 = arith.constant 0 : i32
    return %c0_i32, %c0_i32_0 : i32, i32
  }
  func.func @transform_5(%arg0: i32) -> (i32, i32) {
    %c0_i32 = arith.constant 0 : i32
    %c0_i32_0 = arith.constant 0 : i32
    return %arg0, %c0_i32 : i32, i32
  }
}

</mosaic_0001>

<llo_original>
// kernel: policy_network.1
$region0: #{policy_network.1}
  #allocation0 [shape = 'u32[]', space=smem, size = 0x4, offset = 0x4, fixed_abs, tag = 'smem constant byte address 0x4 - core index']
  #allocation1 [shape = 'u32[144,128]{1,0:T(1,128)}', space=vmem, size = 0x12000, scoped, tag = 'internal scratch']
  %s0 = inlined_call_operand.vmem [shape: f32[512,16], index: 0, kind: input, shape index: {}]
  %s1 = inlined_call_operand.vmem [shape: f32[16,32], index: 1, kind: input, shape index: {}]
  %s2 = inlined_call_operand.vmem [shape: f32[1,32], index: 2, kind: input, shape index: {}]
  %s3 = inlined_call_operand.vmem [shape: f32[32,128], index: 3, kind: input, shape index: {}]
  %s4 = inlined_call_operand.vmem [shape: f32[1,128], index: 4, kind: input, shape index: {}]
  %s5 = inlined_call_operand.vmem [shape: f32[512,128], index: 5, kind: output, shape index: {}]
  %s6 = sld [smem:[#allocation0]]
  $region30: #{policy_network.1} parent=0
    _
  %s8 = ssub.s32 1, %s6
  %s9 = scalar_select 0, %s8, %s6
  // Predicated region
  $region2: #{policy_network.1} parent=0 // pred_check
    _
  $region3: #{policy_network.1} parent=0 // pred_check_branch
    %11 = sbr.rel (0) target = $region5
  $region4: #{policy_network.1} parent=0 // pred_region
    _
  $region5: #{policy_network.1} parent=0 // pred_fallthru
    _
  // Predicated region
  $region6: #{policy_network.1} parent=0 // pred_check
    _
  $region7: #{policy_network.1} parent=0 // pred_check_branch
    %13 = sbr.rel (0) target = $region9
  $region8: #{policy_network.1} parent=0 // pred_region
    _
  $region9: #{policy_network.1} parent=0 // pred_fallthru
    _
  // Predicated region
  $region10: #{policy_network.1} parent=0 // pred_check
    _
  $region11: #{policy_network.1} parent=0 // pred_check_branch
    %15 = sbr.rel (0) target = $region13
  $region12: #{policy_network.1} parent=0 // pred_region
    _
  $region13: #{policy_network.1} parent=0 // pred_fallthru
    _
  // Predicated region
  $region14: #{policy_network.1} parent=0 // pred_check
    _
  $region15: #{policy_network.1} parent=0 // pred_check_branch
    %17 = sbr.rel (0) target = $region17
  $region16: #{policy_network.1} parent=0 // pred_region
    _
  $region17: #{policy_network.1} parent=0 // pred_fallthru
    _
  // Predicated region
  $region18: #{policy_network.1} parent=0 // pred_check
    _
  $region19: #{policy_network.1} parent=0 // pred_check_branch
    %19 = sbr.rel (0) target = $region21
  $region20: #{policy_network.1} parent=0 // pred_region
    _
  $region21: #{policy_network.1} parent=0 // pred_fallthru
    _
  %v20 = vld [vmem:[%s0] sm:$0xff]
  %v21 = vld [vmem:[%s0 + $0x8] sm:$0xff]
  %v22 = vld [vmem:[%s0 + $0x10] sm:$0xff]
  %v23 = vld [vmem:[%s0 + $0x18] sm:$0xff]
  %v24 = vld [vmem:[%s0 + $0x20] sm:$0xff]
  %v25 = vld [vmem:[%s0 + $0x28] sm:$0xff]
  %v26 = vld [vmem:[%s0 + $0x30] sm:$0xff]
  %v27 = vld [vmem:[%s0 + $0x38] sm:$0xff]
  %v28 = vld [vmem:[%s0 + $0x40] sm:$0xff]
  %v29 = vld [vmem:[%s0 + $0x48] sm:$0xff]
  %v30 = vld [vmem:[%s0 + $0x50] sm:$0xff]
  %v31 = vld [vmem:[%s0 + $0x58] sm:$0xff]
  %v32 = vld [vmem:[%s0 + $0x60] sm:$0xff]
  %v33 = vld [vmem:[%s0 + $0x68] sm:$0xff]
  %v34 = vld [vmem:[%s0 + $0x70] sm:$0xff]
  %v35 = vld [vmem:[%s0 + $0x78] sm:$0xff]
  %v36 = vld [vmem:[%s0 + $0x80] sm:$0xff]
  %v37 = vld [vmem:[%s0 + $0x88] sm:$0xff]
  %v38 = vld [vmem:[%s0 + $0x90] sm:$0xff]
  %v39 = vld [vmem:[%s0 + $0x98] sm:$0xff]
  %v40 = vld [vmem:[%s0 + $0xa0] sm:$0xff]
  %v41 = vld [vmem:[%s0 + $0xa8] sm:$0xff]
  %v42 = vld [vmem:[%s0 + $0xb0] sm:$0xff]
  %v43 = vld [vmem:[%s0 + $0xb8] sm:$0xff]
  %v44 = vld [vmem:[%s0 + $0xc0] sm:$0xff]
  %v45 = vld [vmem:[%s0 + $0xc8] sm:$0xff]
  %v46 = vld [vmem:[%s0 + $0xd0] sm:$0xff]
  %v47 = vld [vmem:[%s0 + $0xd8] sm:$0xff]
  %v48 = vld [vmem:[%s0 + $0xe0] sm:$0xff]
  %v49 = vld [vmem:[%s0 + $0xe8] sm:$0xff]
  %v50 = vld [vmem:[%s0 + $0xf0] sm:$0xff]
  %v51 = vld [vmem:[%s0 + $0xf8] sm:$0xff]
  %v52 = vld [vmem:[%s0 + $0x100] sm:$0xff]
  %v53 = vld [vmem:[%s0 + $0x108] sm:$0xff]
  %v54 = vld [vmem:[%s0 + $0x110] sm:$0xff]
  %v55 = vld [vmem:[%s0 + $0x118] sm:$0xff]
  %v56 = vld [vmem:[%s0 + $0x120] sm:$0xff]
  %v57 = vld [vmem:[%s0 + $0x128] sm:$0xff]
  %v58 = vld [vmem:[%s0 + $0x130] sm:$0xff]
  %v59 = vld [vmem:[%s0 + $0x138] sm:$0xff]
  %v60 = vld [vmem:[%s0 + $0x140] sm:$0xff]
  %v61 = vld [vmem:[%s0 + $0x148] sm:$0xff]
  %v62 = vld [vmem:[%s0 + $0x150] sm:$0xff]
  %v63 = vld [vmem:[%s0 + $0x158] sm:$0xff]
  %v64 = vld [vmem:[%s0 + $0x160] sm:$0xff]
  %v65 = vld [vmem:[%s0 + $0x168] sm:$0xff]
  %v66 = vld [vmem:[%s0 + $0x170] sm:$0xff]
  %v67 = vld [vmem:[%s0 + $0x178] sm:$0xff]
  %v68 = vld [vmem:[%s0 + $0x180] sm:$0xff]
  %v69 = vld [vmem:[%s0 + $0x188] sm:$0xff]
  %v70 = vld [vmem:[%s0 + $0x190] sm:$0xff]
  %v71 = vld [vmem:[%s0 + $0x198] sm:$0xff]
  %v72 = vld [vmem:[%s0 + $0x1a0] sm:$0xff]
  %v73 = vld [vmem:[%s0 + $0x1a8] sm:$0xff]
  %v74 = vld [vmem:[%s0 + $0x1b0] sm:$0xff]
  %v75 = vld [vmem:[%s0 + $0x1b8] sm:$0xff]
  %v76 = vld [vmem:[%s0 + $0x1c0] sm:$0xff]
  %v77 = vld [vmem:[%s0 + $0x1c8] sm:$0xff]
  %v78 = vld [vmem:[%s0 + $0x1d0] sm:$0xff]
  %v79 = vld [vmem:[%s0 + $0x1d8] sm:$0xff]
  %v80 = vld [vmem:[%s0 + $0x1e0] sm:$0xff]
  %v81 = vld [vmem:[%s0 + $0x1e8] sm:$0xff]
  %v82 = vld [vmem:[%s0 + $0x1f0] sm:$0xff]
  %v83 = vld [vmem:[%s0 + $0x1f8] sm:$0xff]
  %v84 = vld [vmem:[%s1] sm:$0xff]
  %v85 = vld [vmem:[%s1 + $0x8] sm:$0xff]
  %v86 = vld [vmem:[%s2] sm:$0x1]
  %v88 = vlaneseq
  %v89 = vshrl.u32 %v88, 7
  %v90 = vsub.s32 0, %v89
  %v91 = vrot.slane %v86, %v90
  %vm93 = vcmask 130048
  %v95 = vsel %vm93, %v20, 0
  %v98 = vsel %vm93, %v21, 0
  %v101 = vsel %vm93, %v22, 0
  %v104 = vsel %vm93, %v23, 0
  %v107 = vsel %vm93, %v24, 0
  %v110 = vsel %vm93, %v25, 0
  %v113 = vsel %vm93, %v26, 0
  %v116 = vsel %vm93, %v27, 0
  %v119 = vsel %vm93, %v28, 0
  %v122 = vsel %vm93, %v29, 0
  %v125 = vsel %vm93, %v30, 0
  %v128 = vsel %vm93, %v31, 0
  %v131 = vsel %vm93, %v32, 0
  %v134 = vsel %vm93, %v33, 0
  %v137 = vsel %vm93, %v34, 0
  %v140 = vsel %vm93, %v35, 0
  %v143 = vsel %vm93, %v36, 0
  %v146 = vsel %vm93, %v37, 0
  %v149 = vsel %vm93, %v38, 0
  %v152 = vsel %vm93, %v39, 0
  %v155 = vsel %vm93, %v40, 0
  %v158 = vsel %vm93, %v41, 0
  %v161 = vsel %vm93, %v42, 0
  %v164 = vsel %vm93, %v43, 0
  %v167 = vsel %vm93, %v44, 0
  %v170 = vsel %vm93, %v45, 0
  %v173 = vsel %vm93, %v46, 0
  %v176 = vsel %vm93, %v47, 0
  %v179 = vsel %vm93, %v48, 0
  %v182 = vsel %vm93, %v49, 0
  %v185 = vsel %vm93, %v50, 0
  %v188 = vsel %vm93, %v51, 0
  %v191 = vsel %vm93, %v52, 0
  %v194 = vsel %vm93, %v53, 0
  %v197 = vsel %vm93, %v54, 0
  %v200 = vsel %vm93, %v55, 0
  %v203 = vsel %vm93, %v56, 0
  %v206 = vsel %vm93, %v57, 0
  %v209 = vsel %vm93, %v58, 0
  %v212 = vsel %vm93, %v59, 0
  %v215 = vsel %vm93, %v60, 0
  %v218 = vsel %vm93, %v61, 0
  %v221 = vsel %vm93, %v62, 0
  %v224 = vsel %vm93, %v63, 0
  %v227 = vsel %vm93, %v64, 0
  %v230 = vsel %vm93, %v65, 0
  %v233 = vsel %vm93, %v66, 0
  %v236 = vsel %vm93, %v67, 0
  %v239 = vsel %vm93, %v68, 0
  %v242 = vsel %vm93, %v69, 0
  %v245 = vsel %vm93, %v70, 0
  %v248 = vsel %vm93, %v71, 0
  %v251 = vsel %vm93, %v72, 0
  %v254 = vsel %vm93, %v73, 0
  %v257 = vsel %vm93, %v74, 0
  %v260 = vsel %vm93, %v75, 0
  %v263 = vsel %vm93, %v76, 0
  %v266 = vsel %vm93, %v77, 0
  %v269 = vsel %vm93, %v78, 0
  %v272 = vsel %vm93, %v79, 0
  %v275 = vsel %vm93, %v80, 0
  %v278 = vsel %vm93, %v81, 0
  %v281 = vsel %vm93, %v82, 0
  %v284 = vsel %vm93, %v83, 0
  %286 = vmatprep.subr.mxu0 0.0
  %287 = vmatpush1.msra.mxu0 %v84
  %288 = vmatprep.subr.mxu0 0.0
  %289 = vmatpush1.msra.mxu0 %v85
  %290 = vmatprep.subr.mxu0 0.0
  %291 = vmatpush1.msra.mxu0 0.0
  %292 = vmatprep.subr.mxu0 0.0
  %293 = vmatpush1.msra.mxu0 0.0
  %294 = vmatprep.subr.mxu0 0.0
  %295 = vmatpush1.msra.mxu0 0.0
  %296 = vmatprep.subr.mxu0 0.0
  %297 = vmatpush1.msra.mxu0 0.0
  %298 = vmatprep.subr.mxu0 0.0
  %299 = vmatpush1.msra.mxu0 0.0
  %300 = vmatprep.subr.mxu0 0.0
  %301 = vmatpush1.msra.mxu0 0.0
  %302 = vmatprep.subr.mxu0 0.0
  %303 = vmatpush1.msra.mxu0 0.0
  %304 = vmatprep.subr.mxu0 0.0
  %305 = vmatpush1.msra.mxu0 0.0
  %306 = vmatprep.subr.mxu0 0.0
  %307 = vmatpush1.msra.mxu0 0.0
  %308 = vmatprep.subr.mxu0 0.0
  %309 = vmatpush1.msra.mxu0 0.0
  %310 = vmatprep.subr.mxu0 0.0
  %311 = vmatpush1.msra.mxu0 0.0
  %312 = vmatprep.subr.mxu0 0.0
  %313 = vmatpush1.msra.mxu0 0.0
  %314 = vmatprep.subr.mxu0 0.0
  %315 = vmatpush1.msra.mxu0 0.0
  %316 = vmatprep.subr.mxu0 0.0
  %317 = vmatpush1.msra.mxu0 0.0
  %318 = vmatprep.subr.mxu0 0.0
  %319 = vmatpush1.msra.mxu0 0.0
  %320 = vmatprep.subr.mxu0 0.0
  %321 = vmatpush1.msra.mxu0 0.0
  %322 = vmatprep.subr.mxu0 0.0
  %323 = vmatpush1.msra.mxu0 0.0
  %324 = vmatprep.subr.mxu0 0.0
  %325 = vmatpush1.msra.mxu0 0.0
  %326 = vmatprep.subr.mxu0 0.0
  %327 = vmatpush1.msra.mxu0 0.0
  %328 = vmatprep.subr.mxu0 0.0
  %329 = vmatpush1.msra.mxu0 0.0
  %330 = vmatprep.subr.mxu0 0.0
  %331 = vmatpush1.msra.mxu0 0.0
  %332 = vmatprep.subr.mxu0 0.0
  %333 = vmatpush1.msra.mxu0 0.0
  %334 = vmatprep.subr.mxu0 0.0
  %335 = vmatpush1.msra.mxu0 0.0
  %336 = vmatprep.subr.mxu0 0.0
  %337 = vmatpush1.msra.mxu0 0.0
  %338 = vmatprep.subr.mxu0 0.0
  %339 = vmatpush1.msra.mxu0 0.0
  %340 = vmatprep.subr.mxu0 0.0
  %341 = vmatpush1.msra.mxu0 0.0
  %342 = vmatprep.subr.mxu0 0.0
  %343 = vmatpush1.msra.mxu0 0.0
  %344 = vmatprep.subr.mxu0 0.0
  %345 = vmatpush1.msra.mxu0 0.0
  %346 = vmatprep.subr.mxu0 0.0
  %347 = vmatpush1.msra.mxu0 0.0
  %348 = vmatprep.subr.mxu0 0.0
  %349 = vmatpush1.msra.mxu0 0.0
  %350 = vmatprep.mubr.f32.mxu0 0.0
  %351 = vmatmul.mubr.f32.gmra.mrb[0].mxu0 %v95
  %v352 = vpop.f32.mrb[0].mxu0
  %v353 = vadd.f32 %v91, %v352
  %v354 = vpop.f32.mrb[0].mxu0
  %355 = vmatprep.mubr.f32.mxu0 0.0
  %356 = vmatmul.mubr.f32.gmra.mrb[0].mxu0 %v98
  %v357 = vpop.f32.mrb[0].mxu0
  %v358 = vadd.f32 %v91, %v357
  %v359 = vpop.f32.mrb[0].mxu0
  %360 = vmatprep.mubr.f32.mxu0 0.0
  %361 = vmatmul.mubr.f32.gmra.mrb[0].mxu0 %v101
  %v362 = vpop.f32.mrb[0].mxu0
  %v363 = vadd.f32 %v91, %v362
  %v364 = vpop.f32.mrb[0].mxu0
  %365 = vmatprep.mubr.f32.mxu0 0.0
  %366 = vmatmul.mubr.f32.gmra.mrb[0].mxu0 %v104
  %v367 = vpop.f32.mrb[0].mxu0
  %v368 = vadd.f32 %v91, %v367
  %v369 = vpop.f32.mrb[0].mxu0
  %370 = vmatprep.mubr.f32.mxu0 0.0
  %371 = vmatmul.mubr.f32.gmra.mrb[0].mxu0 %v107
  %v372 = vpop.f32.mrb[0].mxu0
  %v373 = vadd.f32 %v91, %v372
  %v374 = vpop.f32.mrb[0].mxu0
  %375 = vmatprep.mubr.f32.mxu0 0.0
  %376 = vmatmul.mubr.f32.gmra.mrb[0].mxu0 %v110
  %v377 = vpop.f32.mrb[0].mxu0
  %v378 = vadd.f32 %v91, %v377
  %v379 = vpop.f32.mrb[0].mxu0
  %380 = vmatprep.mubr.f32.mxu0 0.0
  %381 = vmatmul.mubr.f32.gmra.mrb[0].mxu0 %v113
  %v382 = vpop.f32.mrb[0].mxu0
  %v383 = vadd.f32 %v91, %v382
  %v384 = vpop.f32.mrb[0].mxu0
  %385 = vmatprep.mubr.f32.mxu0 0.0
  %386 = vmatmul.mubr.f32.gmra.mrb[0].mxu0 %v116
  %v387 = vpop.f32.mrb[0].mxu0
  %v388 = vadd.f32 %v91, %v387
  %v389 = vpop.f32.mrb[0].mxu0
  %390 = vmatprep.mubr.f32.mxu0 0.0
  %391 = vmatmul.mubr.f32.gmra.mrb[0].mxu0 %v119
  %v392 = vpop.f32.mrb[0].mxu0
  %v393 = vadd.f32 %v91, %v392
  %v394 = vpop.f32.mrb[0].mxu0
  %395 = vmatprep.mubr.f32.mxu0 0.0
  %396 = vmatmul.mubr.f32.gmra.mrb[0].mxu0 %v122
  %v397 = vpop.f32.mrb[0].mxu0
  %v398 = vadd.f32 %v91, %v397
  %v399 = vpop.f32.mrb[0].mxu0
  %400 = vmatprep.mubr.f32.mxu0 0.0
  %401 = vmatmul.mubr.f32.gmra.mrb[0].mxu0 %v125
  %v402 = vpop.f32.mrb[0].mxu0
  %v403 = vadd.f32 %v91, %v402
  %v404 = vpop.f32.mrb[0].mxu0
  %405 = vmatprep.mubr.f32.mxu0 0.0
  %406 = vmatmul.mubr.f32.gmra.mrb[0].mxu0 %v128
  %v407 = vpop.f32.mrb[0].mxu0
  %v408 = vadd.f32 %v91, %v407
  %v409 = vpop.f32.mrb[0].mxu0
  %410 = vmatprep.mubr.f32.mxu0 0.0
  %411 = vmatmul.mubr.f32.gmra.mrb[0].mxu0 %v131
  %v412 = vpop.f32.mrb[0].mxu0
  %v413 = vadd.f32 %v91, %v412
  %v414 = vpop.f32.mrb[0].mxu0
  %415 = vmatprep.mubr.f32.mxu0 0.0
  %416 = vmatmul.mubr.f32.gmra.mrb[0].mxu0 %v134
  %v417 = vpop.f32.mrb[0].mxu0
  %v418 = vadd.f32 %v91, %v417
  %v419 = vpop.f32.mrb[0].mxu0
  %420 = vmatprep.mubr.f32.mxu0 0.0
  %421 = vmatmul.mubr.f32.gmra.mrb[0].mxu0 %v137
  %v422 = vpop.f32.mrb[0].mxu0
  %v423 = vadd.f32 %v91, %v422
  %v424 = vpop.f32.mrb[0].mxu0
  %425 = vmatprep.mubr.f32.mxu0 0.0
  %426 = vmatmul.mubr.f32.gmra.mrb[0].mxu0 %v140
  %v427 = vpop.f32.mrb[0].mxu0
  %v428 = vadd.f32 %v91, %v427
  %v429 = vpop.f32.mrb[0].mxu0
  %430 = vmatprep.mubr.f32.mxu0 0.0
  %431 = vmatmul.mubr.f32.gmra.mrb[0].mxu0 %v143
  %v432 = vpop.f32.mrb[0].mxu0
  %v433 = vadd.f32 %v91, %v432
  %v434 = vpop.f32.mrb[0].mxu0
  %435 = vmatprep.mubr.f32.mxu0 0.0
  %436 = vmatmul.mubr.f32.gmra.mrb[0].mxu0 %v146
  %v437 = vpop.f32.mrb[0].mxu0
  %v438 = vadd.f32 %v91, %v437
  %v439 = vpop.f32.mrb[0].mxu0
  %440 = vmatprep.mubr.f32.mxu0 0.0
  %441 = vmatmul.mubr.f32.gmra.mrb[0].mxu0 %v149
  %v442 = vpop.f32.mrb[0].mxu0
  %v443 = vadd.f32 %v91, %v442
  %v444 = vpop.f32.mrb[0].mxu0
  %445 = vmatprep.mubr.f32.mxu0 0.0
  %446 = vmatmul.mubr.f32.gmra.mrb[0].mxu0 %v152
  %v447 = vpop.f32.mrb[0].mxu0
  %v448 = vadd.f32 %v91, %v447
  %v449 = vpop.f32.mrb[0].mxu0
  %450 = vmatprep.mubr.f32.mxu0 0.0
  %451 = vmatmul.mubr.f32.gmra.mrb[0].mxu0 %v155
  %v452 = vpop.f32.mrb[0].mxu0
  %v453 = vadd.f32 %v91, %v452
  %v454 = vpop.f32.mrb[0].mxu0
  %455 = vmatprep.mubr.f32.mxu0 0.0
  %456 = vmatmul.mubr.f32.gmra.mrb[0].mxu0 %v158
  %v457 = vpop.f32.mrb[0].mxu0
  %v458 = vadd.f32 %v91, %v457
  %v459 = vpop.f32.mrb[0].mxu0
  %460 = vmatprep.mubr.f32.mxu0 0.0
  %461 = vmatmul.mubr.f32.gmra.mrb[0].mxu0 %v161
  %v462 = vpop.f32.mrb[0].mxu0
  %v463 = vadd.f32 %v91, %v462
  %v464 = vpop.f32.mrb[0].mxu0
  %465 = vmatprep.mubr.f32.mxu0 0.0
  %466 = vmatmul.mubr.f32.gmra.mrb[0].mxu0 %v164
  %v467 = vpop.f32.mrb[0].mxu0
  %v468 = vadd.f32 %v91, %v467
  %v469 = vpop.f32.mrb[0].mxu0
  %470 = vmatprep.mubr.f32.mxu0 0.0
  %471 = vmatmul.mubr.f32.gmra.mrb[0].mxu0 %v167
  %v472 = vpop.f32.mrb[0].mxu0
  %v473 = vadd.f32 %v91, %v472
  %v474 = vpop.f32.mrb[0].mxu0
  %475 = vmatprep.mubr.f32.mxu0 0.0
  %476 = vmatmul.mubr.f32.gmra.mrb[0].mxu0 %v170
  %v477 = vpop.f32.mrb[0].mxu0
  %v478 = vadd.f32 %v91, %v477
  %v479 = vpop.f32.mrb[0].mxu0
  %480 = vmatprep.mubr.f32.mxu0 0.0
  %481 = vmatmul.mubr.f32.gmra.mrb[0].mxu0 %v173
  %v482 = vpop.f32.mrb[0].mxu0
  %v483 = vadd.f32 %v91, %v482
  %v484 = vpop.f32.mrb[0].mxu0
  %485 = vmatprep.mubr.f32.mxu0 0.0
  %486 = vmatmul.mubr.f32.gmra.mrb[0].mxu0 %v176
  %v487 = vpop.f32.mrb[0].mxu0
  %v488 = vadd.f32 %v91, %v487
  %v489 = vpop.f32.mrb[0].mxu0
  %490 = vmatprep.mubr.f32.mxu0 0.0
  %491 = vmatmul.mubr.f32.gmra.mrb[0].mxu0 %v179
  %v492 = vpop.f32.mrb[0].mxu0
  %v493 = vadd.f32 %v91, %v492
  %v494 = vpop.f32.mrb[0].mxu0
  %495 = vmatprep.mubr.f32.mxu0 0.0
  %496 = vmatmul.mubr.f32.gmra.mrb[0].mxu0 %v182
  %v497 = vpop.f32.mrb[0].mxu0
  %v498 = vadd.f32 %v91, %v497
  %v499 = vpop.f32.mrb[0].mxu0
  %500 = vmatprep.mubr.f32.mxu0 0.0
  %501 = vmatmul.mubr.f32.gmra.mrb[0].mxu0 %v185
  %v502 = vpop.f32.mrb[0].mxu0
  %v503 = vadd.f32 %v91, %v502
  %v504 = vpop.f32.mrb[0].mxu0
  %505 = vmatprep.mubr.f32.mxu0 0.0
  %506 = vmatmul.mubr.f32.gmra.mrb[0].mxu0 %v188
  %v507 = vpop.f32.mrb[0].mxu0
  %v508 = vadd.f32 %v91, %v507
  %v509 = vpop.f32.mrb[0].mxu0
  %510 = vmatprep.mubr.f32.mxu0 0.0
  %511 = vmatmul.mubr.f32.gmra.mrb[0].mxu0 %v191
  %v512 = vpop.f32.mrb[0].mxu0
  %v513 = vadd.f32 %v91, %v512
  %v514 = vpop.f32.mrb[0].mxu0
  %515 = vmatprep.mubr.f32.mxu0 0.0
  %516 = vmatmul.mubr.f32.gmra.mrb[0].mxu0 %v194
  %v517 = vpop.f32.mrb[0].mxu0
  %v518 = vadd.f32 %v91, %v517
  %v519 = vpop.f32.mrb[0].mxu0
  %520 = vmatprep.mubr.f32.mxu0 0.0
  %521 = vmatmul.mubr.f32.gmra.mrb[0].mxu0 %v197
  %v522 = vpop.f32.mrb[0].mxu0
  %v523 = vadd.f32 %v91, %v522
  %v524 = vpop.f32.mrb[0].mxu0
  %525 = vmatprep.mubr.f32.mxu0 0.0
  %526 = vmatmul.mubr.f32.gmra.mrb[0].mxu0 %v200
  %v527 = vpop.f32.mrb[0].mxu0
  %v528 = vadd.f32 %v91, %v527
  %v529 = vpop.f32.mrb[0].mxu0
  %530 = vmatprep.mubr.f32.mxu0 0.0
  %531 = vmatmul.mubr.f32.gmra.mrb[0].mxu0 %v203
  %v532 = vpop.f32.mrb[0].mxu0
  %v533 = vadd.f32 %v91, %v532
  %v534 = vpop.f32.mrb[0].mxu0
  %535 = vmatprep.mubr.f32.mxu0 0.0
  %536 = vmatmul.mubr.f32.gmra.mrb[0].mxu0 %v206
  %v537 = vpop.f32.mrb[0].mxu0
  %v538 = vadd.f32 %v91, %v537
  %v539 = vpop.f32.mrb[0].mxu0
  %540 = vmatprep.mubr.f32.mxu0 0.0
  %541 = vmatmul.mubr.f32.gmra.mrb[0].mxu0 %v209
  %v542 = vpop.f32.mrb[0].mxu0
  %v543 = vadd.f32 %v91, %v542
  %v544 = vpop.f32.mrb[0].mxu0
  %545 = vmatprep.mubr.f32.mxu0 0.0
  %546 = vmatmul.mubr.f32.gmra.mrb[0].mxu0 %v212
  %v547 = vpop.f32.mrb[0].mxu0
  %v548 = vadd.f32 %v91, %v547
  %v549 = vpop.f32.mrb[0].mxu0
  %550 = vmatprep.mubr.f32.mxu0 0.0
  %551 = vmatmul.mubr.f32.gmra.mrb[0].mxu0 %v215
  %v552 = vpop.f32.mrb[0].mxu0
  %v553 = vadd.f32 %v91, %v552
  %v554 = vpop.f32.mrb[0].mxu0
  %555 = vmatprep.mubr.f32.mxu0 0.0
  %556 = vmatmul.mubr.f32.gmra.mrb[0].mxu0 %v218
  %v557 = vpop.f32.mrb[0].mxu0
  %v558 = vadd.f32 %v91, %v557
  %v559 = vpop.f32.mrb[0].mxu0
  %560 = vmatprep.mubr.f32.mxu0 0.0
  %561 = vmatmul.mubr.f32.gmra.mrb[0].mxu0 %v221
  %v562 = vpop.f32.mrb[0].mxu0
  %v563 = vadd.f32 %v91, %v562
  %v564 = vpop.f32.mrb[0].mxu0
  %565 = vmatprep.mubr.f32.mxu0 0.0
  %566 = vmatmul.mubr.f32.gmra.mrb[0].mxu0 %v224
  %v567 = vpop.f32.mrb[0].mxu0
  %v568 = vadd.f32 %v91, %v567
  %v569 = vpop.f32.mrb[0].mxu0
  %570 = vmatprep.mubr.f32.mxu0 0.0
  %571 = vmatmul.mubr.f32.gmra.mrb[0].mxu0 %v227
  %v572 = vpop.f32.mrb[0].mxu0
  %v573 = vadd.f32 %v91, %v572
  %v574 = vpop.f32.mrb[0].mxu0
  %575 = vmatprep.mubr.f32.mxu0 0.0
  %576 = vmatmul.mubr.f32.gmra.mrb[0].mxu0 %v230
  %v577 = vpop.f32.mrb[0].mxu0
  %v578 = vadd.f32 %v91, %v577
  %v579 = vpop.f32.mrb[0].mxu0
  %580 = vmatprep.mubr.f32.mxu0 0.0
  %581 = vmatmul.mubr.f32.gmra.mrb[0].mxu0 %v233
  %v582 = vpop.f32.mrb[0].mxu0
  %v583 = vadd.f32 %v91, %v582
  %v584 = vpop.f32.mrb[0].mxu0
  %585 = vmatprep.mubr.f32.mxu0 0.0
  %586 = vmatmul.mubr.f32.gmra.mrb[0].mxu0 %v236
  %v587 = vpop.f32.mrb[0].mxu0
  %v588 = vadd.f32 %v91, %v587
  %v589 = vpop.f32.mrb[0].mxu0
  %590 = vmatprep.mubr.f32.mxu0 0.0
  %591 = vmatmul.mubr.f32.gmra.mrb[0].mxu0 %v239
  %v592 = vpop.f32.mrb[0].mxu0
  %v593 = vadd.f32 %v91, %v592
  %v594 = vpop.f32.mrb[0].mxu0
  %595 = vmatprep.mubr.f32.mxu0 0.0
  %596 = vmatmul.mubr.f32.gmra.mrb[0].mxu0 %v242
  %v597 = vpop.f32.mrb[0].mxu0
  %v598 = vadd.f32 %v91, %v597
  %v599 = vpop.f32.mrb[0].mxu0
  %600 = vmatprep.mubr.f32.mxu0 0.0
  %601 = vmatmul.mubr.f32.gmra.mrb[0].mxu0 %v245
  %v602 = vpop.f32.mrb[0].mxu0
  %v603 = vadd.f32 %v91, %v602
  %v604 = vpop.f32.mrb[0].mxu0
  %605 = vmatprep.mubr.f32.mxu0 0.0
  %606 = vmatmul.mubr.f32.gmra.mrb[0].mxu0 %v248
  %v607 = vpop.f32.mrb[0].mxu0
  %v608 = vadd.f32 %v91, %v607
  %v609 = vpop.f32.mrb[0].mxu0
  %610 = vmatprep.mubr.f32.mxu0 0.0
  %611 = vmatmul.mubr.f32.gmra.mrb[0].mxu0 %v251
  %v612 = vpop.f32.mrb[0].mxu0
  %v613 = vadd.f32 %v91, %v612
  %v614 = vpop.f32.mrb[0].mxu0
  %615 = vmatprep.mubr.f32.mxu0 0.0
  %616 = vmatmul.mubr.f32.gmra.mrb[0].mxu0 %v254
  %v617 = vpop.f32.mrb[0].mxu0
  %v618 = vadd.f32 %v91, %v617
  %v619 = vpop.f32.mrb[0].mxu0
  %620 = vmatprep.mubr.f32.mxu0 0.0
  %621 = vmatmul.mubr.f32.gmra.mrb[0].mxu0 %v257
  %v622 = vpop.f32.mrb[0].mxu0
  %v623 = vadd.f32 %v91, %v622
  %v624 = vpop.f32.mrb[0].mxu0
  %625 = vmatprep.mubr.f32.mxu0 0.0
  %626 = vmatmul.mubr.f32.gmra.mrb[0].mxu0 %v260
  %v627 = vpop.f32.mrb[0].mxu0
  %v628 = vadd.f32 %v91, %v627
  %v629 = vpop.f32.mrb[0].mxu0
  %630 = vmatprep.mubr.f32.mxu0 0.0
  %631 = vmatmul.mubr.f32.gmra.mrb[0].mxu0 %v263
  %v632 = vpop.f32.mrb[0].mxu0
  %v633 = vadd.f32 %v91, %v632
  %v634 = vpop.f32.mrb[0].mxu0
  %635 = vmatprep.mubr.f32.mxu0 0.0
  %636 = vmatmul.mubr.f32.gmra.mrb[0].mxu0 %v266
  %v637 = vpop.f32.mrb[0].mxu0
  %v638 = vadd.f32 %v91, %v637
  %v639 = vpop.f32.mrb[0].mxu0
  %640 = vmatprep.mubr.f32.mxu0 0.0
  %641 = vmatmul.mubr.f32.gmra.mrb[0].mxu0 %v269
  %v642 = vpop.f32.mrb[0].mxu0
  %v643 = vadd.f32 %v91, %v642
  %v644 = vpop.f32.mrb[0].mxu0
  %645 = vmatprep.mubr.f32.mxu0 0.0
  %646 = vmatmul.mubr.f32.gmra.mrb[0].mxu0 %v272
  %v647 = vpop.f32.mrb[0].mxu0
  %v648 = vadd.f32 %v91, %v647
  %v649 = vpop.f32.mrb[0].mxu0
  %650 = vmatprep.mubr.f32.mxu0 0.0
  %651 = vmatmul.mubr.f32.gmra.mrb[0].mxu0 %v275
  %v652 = vpop.f32.mrb[0].mxu0
  %v653 = vadd.f32 %v91, %v652
  %v654 = vpop.f32.mrb[0].mxu0
  %655 = vmatprep.mubr.f32.mxu0 0.0
  %656 = vmatmul.mubr.f32.gmra.mrb[0].mxu0 %v278
  %v657 = vpop.f32.mrb[0].mxu0
  %v658 = vadd.f32 %v91, %v657
  %v659 = vpop.f32.mrb[0].mxu0
  %660 = vmatprep.mubr.f32.mxu0 0.0
  %661 = vmatmul.mubr.f32.gmra.mrb[0].mxu0 %v281
  %v662 = vpop.f32.mrb[0].mxu0
  %v663 = vadd.f32 %v91, %v662
  %v664 = vpop.f32.mrb[0].mxu0
  %665 = vmatprep.mubr.f32.mxu0 0.0
  %666 = vmatmul.mubr.f32.gmra.mrb[0].mxu0 %v284
  %v667 = vpop.f32.mrb[0].mxu0
  %v668 = vadd.f32 %v91, %v667
  %v669 = vpop.f32.mrb[0].mxu0
  %670 = vdwg.mxu0
  %v671 = vmax.f32 %v353, 0.0
  %v672 = vmax.f32 %v358, 0.0
  %v673 = vmax.f32 %v363, 0.0
  %v674 = vmax.f32 %v368, 0.0
  %v675 = vmax.f32 %v373, 0.0
  %v676 = vmax.f32 %v378, 0.0
  %v677 = vmax.f32 %v383, 0.0
  %v678 = vmax.f32 %v388, 0.0
  %v679 = vmax.f32 %v393, 0.0
  %v680 = vmax.f32 %v398, 0.0
  %v681 = vmax.f32 %v403, 0.0
  %v682 = vmax.f32 %v408, 0.0
  %v683 = vmax.f32 %v413, 0.0
  %v684 = vmax.f32 %v418, 0.0
  %v685 = vmax.f32 %v423, 0.0
  %v686 = vmax.f32 %v428, 0.0
  %v687 = vmax.f32 %v433, 0.0
  %v688 = vmax.f32 %v438, 0.0
  %v689 = vmax.f32 %v443, 0.0
  %v690 = vmax.f32 %v448, 0.0
  %v691 = vmax.f32 %v453, 0.0
  %v692 = vmax.f32 %v458, 0.0
  %v693 = vmax.f32 %v463, 0.0
  %v694 = vmax.f32 %v468, 0.0
  %v695 = vmax.f32 %v473, 0.0
  %v696 = vmax.f32 %v478, 0.0
  %v697 = vmax.f32 %v483, 0.0
  %v698 = vmax.f32 %v488, 0.0
  %v699 = vmax.f32 %v493, 0.0
  %v700 = vmax.f32 %v498, 0.0
  %v701 = vmax.f32 %v503, 0.0
  %v702 = vmax.f32 %v508, 0.0
  %v703 = vmax.f32 %v513, 0.0
  %v704 = vmax.f32 %v518, 0.0
  %v705 = vmax.f32 %v523, 0.0
  %v706 = vmax.f32 %v528, 0.0
  %v707 = vmax.f32 %v533, 0.0
  %v708 = vmax.f32 %v538, 0.0
  %v709 = vmax.f32 %v543, 0.0
  %v710 = vmax.f32 %v548, 0.0
  %v711 = vmax.f32 %v553, 0.0
  %v712 = vmax.f32 %v558, 0.0
  %v713 = vmax.f32 %v563, 0.0
  %v714 = vmax.f32 %v568, 0.0
  %v715 = vmax.f32 %v573, 0.0
  %v716 = vmax.f32 %v578, 0.0
  %v717 = vmax.f32 %v583, 0.0
  %v718 = vmax.f32 %v588, 0.0
  %v719 = vmax.f32 %v593, 0.0
  %v720 = vmax.f32 %v598, 0.0
  %v721 = vmax.f32 %v603, 0.0
  %v722 = vmax.f32 %v608, 0.0
  %v723 = vmax.f32 %v613, 0.0
  %v724 = vmax.f32 %v618, 0.0
  %v725 = vmax.f32 %v623, 0.0
  %v726 = vmax.f32 %v628, 0.0
  %v727 = vmax.f32 %v633, 0.0
  %v728 = vmax.f32 %v638, 0.0
  %v729 = vmax.f32 %v643, 0.0
  %v730 = vmax.f32 %v648, 0.0
  %v731 = vmax.f32 %v653, 0.0
  %v732 = vmax.f32 %v658, 0.0
  %v733 = vmax.f32 %v663, 0.0
  %v734 = vmax.f32 %v668, 0.0
  %v735 = vld [vmem:[%s3] sm:$0xff]
  %v736 = vld [vmem:[%s3 + $0x8] sm:$0xff]
  %v737 = vld [vmem:[%s3 + $0x10] sm:$0xff]
  %v738 = vld [vmem:[%s3 + $0x18] sm:$0xff]
  %v739 = vld [vmem:[%s4] sm:$0x1]
  %v741 = vlaneseq
  %v742 = vshrl.u32 %v741, 7
  %v743 = vsub.s32 0, %v742
  %v744 = vrot.slane %v739, %v743
  %vm746 = vcmask 261120
  %v748 = vsel %vm746, %v671, 0
  %v751 = vsel %vm746, %v672, 0
  %v754 = vsel %vm746, %v673, 0
  %v757 = vsel %vm746, %v674, 0
  %v760 = vsel %vm746, %v675, 0
  %v763 = vsel %vm746, %v676, 0
  %v766 = vsel %vm746, %v677, 0
  %v769 = vsel %vm746, %v678, 0
  %v772 = vsel %vm746, %v679, 0
  %v775 = vsel %vm746, %v680, 0
  %v778 = vsel %vm746, %v681, 0
  %v781 = vsel %vm746, %v682, 0
  %v784 = vsel %vm746, %v683, 0
  %v787 = vsel %vm746, %v684, 0
  %v790 = vsel %vm746, %v685, 0
  %v793 = vsel %vm746, %v686, 0
  %v796 = vsel %vm746, %v687, 0
  %v799 = vsel %vm746, %v688, 0
  %v802 = vsel %vm746, %v689, 0
  %v805 = vsel %vm746, %v690, 0
  %v808 = vsel %vm746, %v691, 0
  %v811 = vsel %vm746, %v692, 0
  %v814 = vsel %vm746, %v693, 0
  %v817 = vsel %vm746, %v694, 0
  %v820 = vsel %vm746, %v695, 0
  %v823 = vsel %vm746, %v696, 0
  %v826 = vsel %vm746, %v697, 0
  %v829 = vsel %vm746, %v698, 0
  %v832 = vsel %vm746, %v699, 0
  %v835 = vsel %vm746, %v700, 0
  %v838 = vsel %vm746, %v701, 0
  %v841 = vsel %vm746, %v702, 0
  %v844 = vsel %vm746, %v703, 0
  %v847 = vsel %vm746, %v704, 0
  %v850 = vsel %vm746, %v705, 0
  %v853 = vsel %vm746, %v706, 0
  %v856 = vsel %vm746, %v707, 0
  %v859 = vsel %vm746, %v708, 0
  %v862 = vsel %vm746, %v709, 0
  %v865 = vsel %vm746, %v710, 0
  %v868 = vsel %vm746, %v711, 0
  %v871 = vsel %vm746, %v712, 0
  %v874 = vsel %vm746, %v713, 0
  %v877 = vsel %vm746, %v714, 0
  %v880 = vsel %vm746, %v715, 0
  %v883 = vsel %vm746, %v716, 0
  %v886 = vsel %vm746, %v717, 0
  %v889 = vsel %vm746, %v718, 0
  %v892 = vsel %vm746, %v719, 0
  %v895 = vsel %vm746, %v720, 0
  %v898 = vsel %vm746, %v721, 0
  %v901 = vsel %vm746, %v722, 0
  %v904 = vsel %vm746, %v723, 0
  %v907 = vsel %vm746, %v724, 0
  %v910 = vsel %vm746, %v725, 0
  %v913 = vsel %vm746, %v726, 0
  %v916 = vsel %vm746, %v727, 0
  %v919 = vsel %vm746, %v728, 0
  %v922 = vsel %vm746, %v729, 0
  %v925 = vsel %vm746, %v730, 0
  %v928 = vsel %vm746, %v731, 0
  %v931 = vsel %vm746, %v732, 0
  %v934 = vsel %vm746, %v733, 0
  %v937 = vsel %vm746, %v734, 0
  %939 = vmatprep.subr.mxu0 0.0
  %940 = vmatpush1.msra.mxu0 %v735
  %941 = vmatprep.subr.mxu0 0.0
  %942 = vmatpush1.msra.mxu0 %v736
  %943 = vmatprep.subr.mxu0 0.0
  %944 = vmatpush1.msra.mxu0 %v737
  %945 = vmatprep.subr.mxu0 0.0
  %946 = vmatpush1.msra.mxu0 %v738
  %947 = vmatprep.subr.mxu0 0.0
  %948 = vmatpush1.msra.mxu0 0.0
  %949 = vmatprep.subr.mxu0 0.0
  %950 = vmatpush1.msra.mxu0 0.0
  %951 = vmatprep.subr.mxu0 0.0
  %952 = vmatpush1.msra.mxu0 0.0
  %953 = vmatprep.subr.mxu0 0.0
  %954 = vmatpush1.msra.mxu0 0.0
  %955 = vmatprep.subr.mxu0 0.0
  %956 = vmatpush1.msra.mxu0 0.0
  %957 = vmatprep.subr.mxu0 0.0
  %958 = vmatpush1.msra.mxu0 0.0
  %959 = vmatprep.subr.mxu0 0.0
  %960 = vmatpush1.msra.mxu0 0.0
  %961 = vmatprep.subr.mxu0 0.0
  %962 = vmatpush1.msra.mxu0 0.0
  %963 = vmatprep.subr.mxu0 0.0
  %964 = vmatpush1.msra.mxu0 0.0
  %965 = vmatprep.subr.mxu0 0.0
  %966 = vmatpush1.msra.mxu0 0.0
  %967 = vmatprep.subr.mxu0 0.0
  %968 = vmatpush1.msra.mxu0 0.0
  %969 = vmatprep.subr.mxu0 0.0
  %970 = vmatpush1.msra.mxu0 0.0
  %971 = vmatprep.subr.mxu0 0.0
  %972 = vmatpush1.msra.mxu0 0.0
  %973 = vmatprep.subr.mxu0 0.0
  %974 = vmatpush1.msra.mxu0 0.0
  %975 = vmatprep.subr.mxu0 0.0
  %976 = vmatpush1.msra.mxu0 0.0
  %977 = vmatprep.subr.mxu0 0.0
  %978 = vmatpush1.msra.mxu0 0.0
  %979 = vmatprep.subr.mxu0 0.0
  %980 = vmatpush1.msra.mxu0 0.0
  %981 = vmatprep.subr.mxu0 0.0
  %982 = vmatpush1.msra.mxu0 0.0
  %983 = vmatprep.subr.mxu0 0.0
  %984 = vmatpush1.msra.mxu0 0.0
  %985 = vmatprep.subr.mxu0 0.0
  %986 = vmatpush1.msra.mxu0 0.0
  %987 = vmatprep.subr.mxu0 0.0
  %988 = vmatpush1.msra.mxu0 0.0
  %989 = vmatprep.subr.mxu0 0.0
  %990 = vmatpush1.msra.mxu0 0.0
  %991 = vmatprep.subr.mxu0 0.0
  %992 = vmatpush1.msra.mxu0 0.0
  %993 = vmatprep.subr.mxu0 0.0
  %994 = vmatpush1.msra.mxu0 0.0
  %995 = vmatprep.subr.mxu0 0.0
  %996 = vmatpush1.msra.mxu0 0.0
  %997 = vmatprep.subr.mxu0 0.0
  %998 = vmatpush1.msra.mxu0 0.0
  %999 = vmatprep.subr.mxu0 0.0
  %1000 = vmatpush1.msra.mxu0 0.0
  %1001 = vmatprep.subr.mxu0 0.0
  %1002 = vmatpush1.msra.mxu0 0.0
  %1003 = vmatprep.mubr.f32.mxu0 0.0
  %1004 = vmatmul.mubr.f32.gmra.mrb[0].mxu0 %v748
  %v1005 = vpop.f32.mrb[0].mxu0
  %v1006 = vadd.f32 %v744, %v1005
  %v1007 = vpop.f32.mrb[0].mxu0
  %1008 = vmatprep.mubr.f32.mxu0 0.0
  %1009 = vmatmul.mubr.f32.gmra.mrb[0].mxu0 %v751
  %v1010 = vpop.f32.mrb[0].mxu0
  %v1011 = vadd.f32 %v744, %v1010
  %v1012 = vpop.f32.mrb[0].mxu0
  %1013 = vmatprep.mubr.f32.mxu0 0.0
  %1014 = vmatmul.mubr.f32.gmra.mrb[0].mxu0 %v754
  %v1015 = vpop.f32.mrb[0].mxu0
  %v1016 = vadd.f32 %v744, %v1015
  %v1017 = vpop.f32.mrb[0].mxu0
  %1018 = vmatprep.mubr.f32.mxu0 0.0
  %1019 = vmatmul.mubr.f32.gmra.mrb[0].mxu0 %v757
  %v1020 = vpop.f32.mrb[0].mxu0
  %v1021 = vadd.f32 %v744, %v1020
  %v1022 = vpop.f32.mrb[0].mxu0
  %1023 = vmatprep.mubr.f32.mxu0 0.0
  %1024 = vmatmul.mubr.f32.gmra.mrb[0].mxu0 %v760
  %v1025 = vpop.f32.mrb[0].mxu0
  %v1026 = vadd.f32 %v744, %v1025
  %v1027 = vpop.f32.mrb[0].mxu0
  %1028 = vmatprep.mubr.f32.mxu0 0.0
  %1029 = vmatmul.mubr.f32.gmra.mrb[0].mxu0 %v763
  %v1030 = vpop.f32.mrb[0].mxu0
  %v1031 = vadd.f32 %v744, %v1030
  %v1032 = vpop.f32.mrb[0].mxu0
  %1033 = vmatprep.mubr.f32.mxu0 0.0
  %1034 = vmatmul.mubr.f32.gmra.mrb[0].mxu0 %v766
  %v1035 = vpop.f32.mrb[0].mxu0
  %v1036 = vadd.f32 %v744, %v1035
  %v1037 = vpop.f32.mrb[0].mxu0
  %1038 = vmatprep.mubr.f32.mxu0 0.0
  %1039 = vmatmul.mubr.f32.gmra.mrb[0].mxu0 %v769
  %v1040 = vpop.f32.mrb[0].mxu0
  %v1041 = vadd.f32 %v744, %v1040
  %v1042 = vpop.f32.mrb[0].mxu0
  %1043 = vmatprep.mubr.f32.mxu0 0.0
  %1044 = vmatmul.mubr.f32.gmra.mrb[0].mxu0 %v772
  %v1045 = vpop.f32.mrb[0].mxu0
  %v1046 = vadd.f32 %v744, %v1045
  %v1047 = vpop.f32.mrb[0].mxu0
  %1048 = vmatprep.mubr.f32.mxu0 0.0
  %1049 = vmatmul.mubr.f32.gmra.mrb[0].mxu0 %v775
  %v1050 = vpop.f32.mrb[0].mxu0
  %v1051 = vadd.f32 %v744, %v1050
  %v1052 = vpop.f32.mrb[0].mxu0
  %1053 = vmatprep.mubr.f32.mxu0 0.0
  %1054 = vmatmul.mubr.f32.gmra.mrb[0].mxu0 %v778
  %v1055 = vpop.f32.mrb[0].mxu0
  %v1056 = vadd.f32 %v744, %v1055
  %v1057 = vpop.f32.mrb[0].mxu0
  %1058 = vmatprep.mubr.f32.mxu0 0.0
  %1059 = vmatmul.mubr.f32.gmra.mrb[0].mxu0 %v781
  %v1060 = vpop.f32.mrb[0].mxu0
  %v1061 = vadd.f32 %v744, %v1060
  %v1062 = vpop.f32.mrb[0].mxu0
  %1063 = vmatprep.mubr.f32.mxu0 0.0
  %1064 = vmatmul.mubr.f32.gmra.mrb[0].mxu0 %v784
  %v1065 = vpop.f32.mrb[0].mxu0
  %v1066 = vadd.f32 %v744, %v1065
  %v1067 = vpop.f32.mrb[0].mxu0
  %1068 = vmatprep.mubr.f32.mxu0 0.0
  %1069 = vmatmul.mubr.f32.gmra.mrb[0].mxu0 %v787
  %v1070 = vpop.f32.mrb[0].mxu0
  %v1071 = vadd.f32 %v744, %v1070
  %v1072 = vpop.f32.mrb[0].mxu0
  %1073 = vmatprep.mubr.f32.mxu0 0.0
  %1074 = vmatmul.mubr.f32.gmra.mrb[0].mxu0 %v790
  %v1075 = vpop.f32.mrb[0].mxu0
  %v1076 = vadd.f32 %v744, %v1075
  %v1077 = vpop.f32.mrb[0].mxu0
  %1078 = vmatprep.mubr.f32.mxu0 0.0
  %1079 = vmatmul.mubr.f32.gmra.mrb[0].mxu0 %v793
  %v1080 = vpop.f32.mrb[0].mxu0
  %v1081 = vadd.f32 %v744, %v1080
  %v1082 = vpop.f32.mrb[0].mxu0
  %1083 = vmatprep.mubr.f32.mxu0 0.0
  %1084 = vmatmul.mubr.f32.gmra.mrb[0].mxu0 %v796
  %v1085 = vpop.f32.mrb[0].mxu0
  %v1086 = vadd.f32 %v744, %v1085
  %v1087 = vpop.f32.mrb[0].mxu0
  %1088 = vmatprep.mubr.f32.mxu0 0.0
  %1089 = vmatmul.mubr.f32.gmra.mrb[0].mxu0 %v799
  %v1090 = vpop.f32.mrb[0].mxu0
  %v1091 = vadd.f32 %v744, %v1090
  %v1092 = vpop.f32.mrb[0].mxu0
  %1093 = vmatprep.mubr.f32.mxu0 0.0
  %1094 = vmatmul.mubr.f32.gmra.mrb[0].mxu0 %v802
  %v1095 = vpop.f32.mrb[0].mxu0
  %v1096 = vadd.f32 %v744, %v1095
  %v1097 = vpop.f32.mrb[0].mxu0
  %1098 = vmatprep.mubr.f32.mxu0 0.0
  %1099 = vmatmul.mubr.f32.gmra.mrb[0].mxu0 %v805
  %v1100 = vpop.f32.mrb[0].mxu0
  %v1101 = vadd.f32 %v744, %v1100
  %v1102 = vpop.f32.mrb[0].mxu0
  %1103 = vmatprep.mubr.f32.mxu0 0.0
  %1104 = vmatmul.mubr.f32.gmra.mrb[0].mxu0 %v808
  %v1105 = vpop.f32.mrb[0].mxu0
  %v1106 = vadd.f32 %v744, %v1105
  %v1107 = vpop.f32.mrb[0].mxu0
  %1108 = vmatprep.mubr.f32.mxu0 0.0
  %1109 = vmatmul.mubr.f32.gmra.mrb[0].mxu0 %v811
  %v1110 = vpop.f32.mrb[0].mxu0
  %v1111 = vadd.f32 %v744, %v1110
  %v1112 = vpop.f32.mrb[0].mxu0
  %1113 = vmatprep.mubr.f32.mxu0 0.0
  %1114 = vmatmul.mubr.f32.gmra.mrb[0].mxu0 %v814
  %v1115 = vpop.f32.mrb[0].mxu0
  %v1116 = vadd.f32 %v744, %v1115
  %v1117 = vpop.f32.mrb[0].mxu0
  %1118 = vmatprep.mubr.f32.mxu0 0.0
  %1119 = vmatmul.mubr.f32.gmra.mrb[0].mxu0 %v817
  %v1120 = vpop.f32.mrb[0].mxu0
  %v1121 = vadd.f32 %v744, %v1120
  %v1122 = vpop.f32.mrb[0].mxu0
  %1123 = vmatprep.mubr.f32.mxu0 0.0
  %1124 = vmatmul.mubr.f32.gmra.mrb[0].mxu0 %v820
  %v1125 = vpop.f32.mrb[0].mxu0
  %v1126 = vadd.f32 %v744, %v1125
  %v1127 = vpop.f32.mrb[0].mxu0
  %1128 = vmatprep.mubr.f32.mxu0 0.0
  %1129 = vmatmul.mubr.f32.gmra.mrb[0].mxu0 %v823
  %v1130 = vpop.f32.mrb[0].mxu0
  %v1131 = vadd.f32 %v744, %v1130
  %v1132 = vpop.f32.mrb[0].mxu0
  %1133 = vmatprep.mubr.f32.mxu0 0.0
  %1134 = vmatmul.mubr.f32.gmra.mrb[0].mxu0 %v826
  %v1135 = vpop.f32.mrb[0].mxu0
  %v1136 = vadd.f32 %v744, %v1135
  %v1137 = vpop.f32.mrb[0].mxu0
  %1138 = vmatprep.mubr.f32.mxu0 0.0
  %1139 = vmatmul.mubr.f32.gmra.mrb[0].mxu0 %v829
  %v1140 = vpop.f32.mrb[0].mxu0
  %v1141 = vadd.f32 %v744, %v1140
  %v1142 = vpop.f32.mrb[0].mxu0
  %1143 = vmatprep.mubr.f32.mxu0 0.0
  %1144 = vmatmul.mubr.f32.gmra.mrb[0].mxu0 %v832
  %v1145 = vpop.f32.mrb[0].mxu0
  %v1146 = vadd.f32 %v744, %v1145
  %v1147 = vpop.f32.mrb[0].mxu0
  %1148 = vmatprep.mubr.f32.mxu0 0.0
  %1149 = vmatmul.mubr.f32.gmra.mrb[0].mxu0 %v835
  %v1150 = vpop.f32.mrb[0].mxu0
  %v1151 = vadd.f32 %v744, %v1150
  %v1152 = vpop.f32.mrb[0].mxu0
  %1153 = vmatprep.mubr.f32.mxu0 0.0
  %1154 = vmatmul.mubr.f32.gmra.mrb[0].mxu0 %v838
  %v1155 = vpop.f32.mrb[0].mxu0
  %v1156 = vadd.f32 %v744, %v1155
  %v1157 = vpop.f32.mrb[0].mxu0
  %1158 = vmatprep.mubr.f32.mxu0 0.0
  %1159 = vmatmul.mubr.f32.gmra.mrb[0].mxu0 %v841
  %v1160 = vpop.f32.mrb[0].mxu0
  %v1161 = vadd.f32 %v744, %v1160
  %v1162 = vpop.f32.mrb[0].mxu0
  %1163 = vmatprep.mubr.f32.mxu0 0.0
  %1164 = vmatmul.mubr.f32.gmra.mrb[0].mxu0 %v844
  %v1165 = vpop.f32.mrb[0].mxu0
  %v1166 = vadd.f32 %v744, %v1165
  %v1167 = vpop.f32.mrb[0].mxu0
  %1168 = vmatprep.mubr.f32.mxu0 0.0
  %1169 = vmatmul.mubr.f32.gmra.mrb[0].mxu0 %v847
  %v1170 = vpop.f32.mrb[0].mxu0
  %v1171 = vadd.f32 %v744, %v1170
  %v1172 = vpop.f32.mrb[0].mxu0
  %1173 = vmatprep.mubr.f32.mxu0 0.0
  %1174 = vmatmul.mubr.f32.gmra.mrb[0].mxu0 %v850
  %v1175 = vpop.f32.mrb[0].mxu0
  %v1176 = vadd.f32 %v744, %v1175
  %v1177 = vpop.f32.mrb[0].mxu0
  %1178 = vmatprep.mubr.f32.mxu0 0.0
  %1179 = vmatmul.mubr.f32.gmra.mrb[0].mxu0 %v853
  %v1180 = vpop.f32.mrb[0].mxu0
  %v1181 = vadd.f32 %v744, %v1180
  %v1182 = vpop.f32.mrb[0].mxu0
  %1183 = vmatprep.mubr.f32.mxu0 0.0
  %1184 = vmatmul.mubr.f32.gmra.mrb[0].mxu0 %v856
  %v1185 = vpop.f32.mrb[0].mxu0
  %v1186 = vadd.f32 %v744, %v1185
  %v1187 = vpop.f32.mrb[0].mxu0
  %1188 = vmatprep.mubr.f32.mxu0 0.0
  %1189 = vmatmul.mubr.f32.gmra.mrb[0].mxu0 %v859
  %v1190 = vpop.f32.mrb[0].mxu0
  %v1191 = vadd.f32 %v744, %v1190
  %v1192 = vpop.f32.mrb[0].mxu0
  %1193 = vmatprep.mubr.f32.mxu0 0.0
  %1194 = vmatmul.mubr.f32.gmra.mrb[0].mxu0 %v862
  %v1195 = vpop.f32.mrb[0].mxu0
  %v1196 = vadd.f32 %v744, %v1195
  %v1197 = vpop.f32.mrb[0].mxu0
  %1198 = vmatprep.mubr.f32.mxu0 0.0
  %1199 = vmatmul.mubr.f32.gmra.mrb[0].mxu0 %v865
  %v1200 = vpop.f32.mrb[0].mxu0
  %v1201 = vadd.f32 %v744, %v1200
  %v1202 = vpop.f32.mrb[0].mxu0
  %1203 = vmatprep.mubr.f32.mxu0 0.0
  %1204 = vmatmul.mubr.f32.gmra.mrb[0].mxu0 %v868
  %v1205 = vpop.f32.mrb[0].mxu0
  %v1206 = vadd.f32 %v744, %v1205
  %v1207 = vpop.f32.mrb[0].mxu0
  %1208 = vmatprep.mubr.f32.mxu0 0.0
  %1209 = vmatmul.mubr.f32.gmra.mrb[0].mxu0 %v871
  %v1210 = vpop.f32.mrb[0].mxu0
  %v1211 = vadd.f32 %v744, %v1210
  %v1212 = vpop.f32.mrb[0].mxu0
  %1213 = vmatprep.mubr.f32.mxu0 0.0
  %1214 = vmatmul.mubr.f32.gmra.mrb[0].mxu0 %v874
  %v1215 = vpop.f32.mrb[0].mxu0
  %v1216 = vadd.f32 %v744, %v1215
  %v1217 = vpop.f32.mrb[0].mxu0
  %1218 = vmatprep.mubr.f32.mxu0 0.0
  %1219 = vmatmul.mubr.f32.gmra.mrb[0].mxu0 %v877
  %v1220 = vpop.f32.mrb[0].mxu0
  %v1221 = vadd.f32 %v744, %v1220
  %v1222 = vpop.f32.mrb[0].mxu0
  %1223 = vmatprep.mubr.f32.mxu0 0.0
  %1224 = vmatmul.mubr.f32.gmra.mrb[0].mxu0 %v880
  %v1225 = vpop.f32.mrb[0].mxu0
  %v1226 = vadd.f32 %v744, %v1225
  %v1227 = vpop.f32.mrb[0].mxu0
  %1228 = vmatprep.mubr.f32.mxu0 0.0
  %1229 = vmatmul.mubr.f32.gmra.mrb[0].mxu0 %v883
  %v1230 = vpop.f32.mrb[0].mxu0
  %v1231 = vadd.f32 %v744, %v1230
  %v1232 = vpop.f32.mrb[0].mxu0
  %1233 = vmatprep.mubr.f32.mxu0 0.0
  %1234 = vmatmul.mubr.f32.gmra.mrb[0].mxu0 %v886
  %v1235 = vpop.f32.mrb[0].mxu0
  %v1236 = vadd.f32 %v744, %v1235
  %v1237 = vpop.f32.mrb[0].mxu0
  %1238 = vmatprep.mubr.f32.mxu0 0.0
  %1239 = vmatmul.mubr.f32.gmra.mrb[0].mxu0 %v889
  %v1240 = vpop.f32.mrb[0].mxu0
  %v1241 = vadd.f32 %v744, %v1240
  %v1242 = vpop.f32.mrb[0].mxu0
  %1243 = vmatprep.mubr.f32.mxu0 0.0
  %1244 = vmatmul.mubr.f32.gmra.mrb[0].mxu0 %v892
  %v1245 = vpop.f32.mrb[0].mxu0
  %v1246 = vadd.f32 %v744, %v1245
  %v1247 = vpop.f32.mrb[0].mxu0
  %1248 = vmatprep.mubr.f32.mxu0 0.0
  %1249 = vmatmul.mubr.f32.gmra.mrb[0].mxu0 %v895
  %v1250 = vpop.f32.mrb[0].mxu0
  %v1251 = vadd.f32 %v744, %v1250
  %v1252 = vpop.f32.mrb[0].mxu0
  %1253 = vmatprep.mubr.f32.mxu0 0.0
  %1254 = vmatmul.mubr.f32.gmra.mrb[0].mxu0 %v898
  %v1255 = vpop.f32.mrb[0].mxu0
  %v1256 = vadd.f32 %v744, %v1255
  %v1257 = vpop.f32.mrb[0].mxu0
  %1258 = vmatprep.mubr.f32.mxu0 0.0
  %1259 = vmatmul.mubr.f32.gmra.mrb[0].mxu0 %v901
  %v1260 = vpop.f32.mrb[0].mxu0
  %v1261 = vadd.f32 %v744, %v1260
  %v1262 = vpop.f32.mrb[0].mxu0
  %1263 = vmatprep.mubr.f32.mxu0 0.0
  %1264 = vmatmul.mubr.f32.gmra.mrb[0].mxu0 %v904
  %v1265 = vpop.f32.mrb[0].mxu0
  %v1266 = vadd.f32 %v744, %v1265
  %v1267 = vpop.f32.mrb[0].mxu0
  %1268 = vmatprep.mubr.f32.mxu0 0.0
  %1269 = vmatmul.mubr.f32.gmra.mrb[0].mxu0 %v907
  %v1270 = vpop.f32.mrb[0].mxu0
  %v1271 = vadd.f32 %v744, %v1270
  %v1272 = vpop.f32.mrb[0].mxu0
  %1273 = vmatprep.mubr.f32.mxu0 0.0
  %1274 = vmatmul.mubr.f32.gmra.mrb[0].mxu0 %v910
  %v1275 = vpop.f32.mrb[0].mxu0
  %v1276 = vadd.f32 %v744, %v1275
  %v1277 = vpop.f32.mrb[0].mxu0
  %1278 = vmatprep.mubr.f32.mxu0 0.0
  %1279 = vmatmul.mubr.f32.gmra.mrb[0].mxu0 %v913
  %v1280 = vpop.f32.mrb[0].mxu0
  %v1281 = vadd.f32 %v744, %v1280
  %v1282 = vpop.f32.mrb[0].mxu0
  %1283 = vmatprep.mubr.f32.mxu0 0.0
  %1284 = vmatmul.mubr.f32.gmra.mrb[0].mxu0 %v916
  %v1285 = vpop.f32.mrb[0].mxu0
  %v1286 = vadd.f32 %v744, %v1285
  %v1287 = vpop.f32.mrb[0].mxu0
  %1288 = vmatprep.mubr.f32.mxu0 0.0
  %1289 = vmatmul.mubr.f32.gmra.mrb[0].mxu0 %v919
  %v1290 = vpop.f32.mrb[0].mxu0
  %v1291 = vadd.f32 %v744, %v1290
  %v1292 = vpop.f32.mrb[0].mxu0
  %1293 = vmatprep.mubr.f32.mxu0 0.0
  %1294 = vmatmul.mubr.f32.gmra.mrb[0].mxu0 %v922
  %v1295 = vpop.f32.mrb[0].mxu0
  %v1296 = vadd.f32 %v744, %v1295
  %v1297 = vpop.f32.mrb[0].mxu0
  %1298 = vmatprep.mubr.f32.mxu0 0.0
  %1299 = vmatmul.mubr.f32.gmra.mrb[0].mxu0 %v925
  %v1300 = vpop.f32.mrb[0].mxu0
  %v1301 = vadd.f32 %v744, %v1300
  %v1302 = vpop.f32.mrb[0].mxu0
  %1303 = vmatprep.mubr.f32.mxu0 0.0
  %1304 = vmatmul.mubr.f32.gmra.mrb[0].mxu0 %v928
  %v1305 = vpop.f32.mrb[0].mxu0
  %v1306 = vadd.f32 %v744, %v1305
  %v1307 = vpop.f32.mrb[0].mxu0
  %1308 = vmatprep.mubr.f32.mxu0 0.0
  %1309 = vmatmul.mubr.f32.gmra.mrb[0].mxu0 %v931
  %v1310 = vpop.f32.mrb[0].mxu0
  %v1311 = vadd.f32 %v744, %v1310
  %v1312 = vpop.f32.mrb[0].mxu0
  %1313 = vmatprep.mubr.f32.mxu0 0.0
  %1314 = vmatmul.mubr.f32.gmra.mrb[0].mxu0 %v934
  %v1315 = vpop.f32.mrb[0].mxu0
  %v1316 = vadd.f32 %v744, %v1315
  %v1317 = vpop.f32.mrb[0].mxu0
  %1318 = vmatprep.mubr.f32.mxu0 0.0
  %1319 = vmatmul.mubr.f32.gmra.mrb[0].mxu0 %v937
  %v1320 = vpop.f32.mrb[0].mxu0
  %v1321 = vadd.f32 %v744, %v1320
  %v1322 = vpop.f32.mrb[0].mxu0
  %1323 = vdwg.mxu0
  %1324 = vmax.xlane.f32.xlu0 %v1006
  %v1325 = vpop.xlane.xlu0 %1324
  %1326 = vmax.xlane.f32.xlu0 %v1011
  %v1327 = vpop.xlane.xlu0 %1326
  %1328 = vmax.xlane.f32.xlu0 %v1016
  %v1329 = vpop.xlane.xlu0 %1328
  %1330 = vmax.xlane.f32.xlu0 %v1021
  %v1331 = vpop.xlane.xlu0 %1330
  %1332 = vmax.xlane.f32.xlu0 %v1026
  %v1333 = vpop.xlane.xlu0 %1332
  %1334 = vmax.xlane.f32.xlu0 %v1031
  %v1335 = vpop.xlane.xlu0 %1334
  %1336 = vmax.xlane.f32.xlu0 %v1036
  %v1337 = vpop.xlane.xlu0 %1336
  %1338 = vmax.xlane.f32.xlu0 %v1041
  %v1339 = vpop.xlane.xlu0 %1338
  %1340 = vmax.xlane.f32.xlu0 %v1046
  %v1341 = vpop.xlane.xlu0 %1340
  %1342 = vmax.xlane.f32.xlu0 %v1051
  %v1343 = vpop.xlane.xlu0 %1342
  %1344 = vmax.xlane.f32.xlu0 %v1056
  %v1345 = vpop.xlane.xlu0 %1344
  %1346 = vmax.xlane.f32.xlu0 %v1061
  %v1347 = vpop.xlane.xlu0 %1346
  %1348 = vmax.xlane.f32.xlu0 %v1066
  %v1349 = vpop.xlane.xlu0 %1348
  %1350 = vmax.xlane.f32.xlu0 %v1071
  %v1351 = vpop.xlane.xlu0 %1350
  %1352 = vmax.xlane.f32.xlu0 %v1076
  %v1353 = vpop.xlane.xlu0 %1352
  %1354 = vmax.xlane.f32.xlu0 %v1081
  %v1355 = vpop.xlane.xlu0 %1354
  %1356 = vmax.xlane.f32.xlu0 %v1086
  %v1357 = vpop.xlane.xlu0 %1356
  %1358 = vmax.xlane.f32.xlu0 %v1091
  %v1359 = vpop.xlane.xlu0 %1358
  %1360 = vmax.xlane.f32.xlu0 %v1096
  %v1361 = vpop.xlane.xlu0 %1360
  %1362 = vmax.xlane.f32.xlu0 %v1101
  %v1363 = vpop.xlane.xlu0 %1362
  %1364 = vmax.xlane.f32.xlu0 %v1106
  %v1365 = vpop.xlane.xlu0 %1364
  %1366 = vmax.xlane.f32.xlu0 %v1111
  %v1367 = vpop.xlane.xlu0 %1366
  %1368 = vmax.xlane.f32.xlu0 %v1116
  %v1369 = vpop.xlane.xlu0 %1368
  %1370 = vmax.xlane.f32.xlu0 %v1121
  %v1371 = vpop.xlane.xlu0 %1370
  %1372 = vmax.xlane.f32.xlu0 %v1126
  %v1373 = vpop.xlane.xlu0 %1372
  %1374 = vmax.xlane.f32.xlu0 %v1131
  %v1375 = vpop.xlane.xlu0 %1374
  %1376 = vmax.xlane.f32.xlu0 %v1136
  %v1377 = vpop.xlane.xlu0 %1376
  %1378 = vmax.xlane.f32.xlu0 %v1141
  %v1379 = vpop.xlane.xlu0 %1378
  %1380 = vmax.xlane.f32.xlu0 %v1146
  %v1381 = vpop.xlane.xlu0 %1380
  %1382 = vmax.xlane.f32.xlu0 %v1151
  %v1383 = vpop.xlane.xlu0 %1382
  %1384 = vmax.xlane.f32.xlu0 %v1156
  %v1385 = vpop.xlane.xlu0 %1384
  %1386 = vmax.xlane.f32.xlu0 %v1161
  %v1387 = vpop.xlane.xlu0 %1386
  %1388 = vmax.xlane.f32.xlu0 %v1166
  %v1389 = vpop.xlane.xlu0 %1388
  %1390 = vmax.xlane.f32.xlu0 %v1171
  %v1391 = vpop.xlane.xlu0 %1390
  %1392 = vmax.xlane.f32.xlu0 %v1176
  %v1393 = vpop.xlane.xlu0 %1392
  %1394 = vmax.xlane.f32.xlu0 %v1181
  %v1395 = vpop.xlane.xlu0 %1394
  %1396 = vmax.xlane.f32.xlu0 %v1186
  %v1397 = vpop.xlane.xlu0 %1396
  %1398 = vmax.xlane.f32.xlu0 %v1191
  %v1399 = vpop.xlane.xlu0 %1398
  %1400 = vmax.xlane.f32.xlu0 %v1196
  %v1401 = vpop.xlane.xlu0 %1400
  %1402 = vmax.xlane.f32.xlu0 %v1201
  %v1403 = vpop.xlane.xlu0 %1402
  %1404 = vmax.xlane.f32.xlu0 %v1206
  %v1405 = vpop.xlane.xlu0 %1404
  %1406 = vmax.xlane.f32.xlu0 %v1211
  %v1407 = vpop.xlane.xlu0 %1406
  %1408 = vmax.xlane.f32.xlu0 %v1216
  %v1409 = vpop.xlane.xlu0 %1408
  %1410 = vmax.xlane.f32.xlu0 %v1221
  %v1411 = vpop.xlane.xlu0 %1410
  %1412 = vmax.xlane.f32.xlu0 %v1226
  %v1413 = vpop.xlane.xlu0 %1412
  %1414 = vmax.xlane.f32.xlu0 %v1231
  %v1415 = vpop.xlane.xlu0 %1414
  %1416 = vmax.xlane.f32.xlu0 %v1236
  %v1417 = vpop.xlane.xlu0 %1416
  %1418 = vmax.xlane.f32.xlu0 %v1241
  %v1419 = vpop.xlane.xlu0 %1418
  %1420 = vmax.xlane.f32.xlu0 %v1246
  %v1421 = vpop.xlane.xlu0 %1420
  %1422 = vmax.xlane.f32.xlu0 %v1251
  %v1423 = vpop.xlane.xlu0 %1422
  %1424 = vmax.xlane.f32.xlu0 %v1256
  %v1425 = vpop.xlane.xlu0 %1424
  %1426 = vmax.xlane.f32.xlu0 %v1261
  %v1427 = vpop.xlane.xlu0 %1426
  %1428 = vmax.xlane.f32.xlu0 %v1266
  %v1429 = vpop.xlane.xlu0 %1428
  %1430 = vmax.xlane.f32.xlu0 %v1271
  %v1431 = vpop.xlane.xlu0 %1430
  %1432 = vmax.xlane.f32.xlu0 %v1276
  %v1433 = vpop.xlane.xlu0 %1432
  %1434 = vmax.xlane.f32.xlu0 %v1281
  %v1435 = vpop.xlane.xlu0 %1434
  %1436 = vmax.xlane.f32.xlu0 %v1286
  %v1437 = vpop.xlane.xlu0 %1436
  %1438 = vmax.xlane.f32.xlu0 %v1291
  %v1439 = vpop.xlane.xlu0 %1438
  %1440 = vmax.xlane.f32.xlu0 %v1296
  %v1441 = vpop.xlane.xlu0 %1440
  %1442 = vmax.xlane.f32.xlu0 %v1301
  %v1443 = vpop.xlane.xlu0 %1442
  %1444 = vmax.xlane.f32.xlu0 %v1306
  %v1445 = vpop.xlane.xlu0 %1444
  %1446 = vmax.xlane.f32.xlu0 %v1311
  %v1447 = vpop.xlane.xlu0 %1446
  %1448 = vmax.xlane.f32.xlu0 %v1316
  %v1449 = vpop.xlane.xlu0 %1448
  %1450 = vmax.xlane.f32.xlu0 %v1321
  %v1451 = vpop.xlane.xlu0 %1450
  %v1452 = vsub.f32 %v1006, %v1325
  %v1453 = vsub.f32 %v1011, %v1327
  %v1454 = vsub.f32 %v1016, %v1329
  %v1455 = vsub.f32 %v1021, %v1331
  %v1456 = vsub.f32 %v1026, %v1333
  %v1457 = vsub.f32 %v1031, %v1335
  %v1458 = vsub.f32 %v1036, %v1337
  %v1459 = vsub.f32 %v1041, %v1339
  %v1460 = vsub.f32 %v1046, %v1341
  %v1461 = vsub.f32 %v1051, %v1343
  %v1462 = vsub.f32 %v1056, %v1345
  %v1463 = vsub.f32 %v1061, %v1347
  %v1464 = vsub.f32 %v1066, %v1349
  %v1465 = vsub.f32 %v1071, %v1351
  %v1466 = vsub.f32 %v1076, %v1353
  %v1467 = vsub.f32 %v1081, %v1355
  %v1468 = vsub.f32 %v1086, %v1357
  %v1469 = vsub.f32 %v1091, %v1359
  %v1470 = vsub.f32 %v1096, %v1361
  %v1471 = vsub.f32 %v1101, %v1363
  %v1472 = vsub.f32 %v1106, %v1365
  %v1473 = vsub.f32 %v1111, %v1367
  %v1474 = vsub.f32 %v1116, %v1369
  %v1475 = vsub.f32 %v1121, %v1371
  %v1476 = vsub.f32 %v1126, %v1373
  %v1477 = vsub.f32 %v1131, %v1375
  %v1478 = vsub.f32 %v1136, %v1377
  %v1479 = vsub.f32 %v1141, %v1379
  %v1480 = vsub.f32 %v1146, %v1381
  %v1481 = vsub.f32 %v1151, %v1383
  %v1482 = vsub.f32 %v1156, %v1385
  %v1483 = vsub.f32 %v1161, %v1387
  %v1484 = vsub.f32 %v1166, %v1389
  %v1485 = vsub.f32 %v1171, %v1391
  %v1486 = vsub.f32 %v1176, %v1393
  %v1487 = vsub.f32 %v1181, %v1395
  %v1488 = vsub.f32 %v1186, %v1397
  %v1489 = vsub.f32 %v1191, %v1399
  %v1490 = vsub.f32 %v1196, %v1401
  %v1491 = vsub.f32 %v1201, %v1403
  %v1492 = vsub.f32 %v1206, %v1405
  %v1493 = vsub.f32 %v1211, %v1407
  %v1494 = vsub.f32 %v1216, %v1409
  %v1495 = vsub.f32 %v1221, %v1411
  %v1496 = vsub.f32 %v1226, %v1413
  %v1497 = vsub.f32 %v1231, %v1415
  %v1498 = vsub.f32 %v1236, %v1417
  %v1499 = vsub.f32 %v1241, %v1419
  %v1500 = vsub.f32 %v1246, %v1421
  %v1501 = vsub.f32 %v1251, %v1423
  %v1502 = vsub.f32 %v1256, %v1425
  %v1503 = vsub.f32 %v1261, %v1427
  %v1504 = vsub.f32 %v1266, %v1429
  %v1505 = vsub.f32 %v1271, %v1431
  %v1506 = vsub.f32 %v1276, %v1433
  %v1507 = vsub.f32 %v1281, %v1435
  %v1508 = vsub.f32 %v1286, %v1437
  %v1509 = vsub.f32 %v1291, %v1439
  %v1510 = vsub.f32 %v1296, %v1441
  %v1511 = vsub.f32 %v1301, %v1443
  %v1512 = vsub.f32 %v1306, %v1445
  %v1513 = vsub.f32 %v1311, %v1447
  %v1514 = vsub.f32 %v1316, %v1449
  %v1515 = vsub.f32 %v1321, %v1451
  %v1516 = vmul.f32 %v1452, 1.442695
  %v1517 = vpow.pop %v1516
  %v1518 = vmul.f32 %v1453, 1.442695
  %v1519 = vpow.pop %v1518
  %v1520 = vmul.f32 %v1454, 1.442695
  %v1521 = vpow.pop %v1520
  %v1522 = vmul.f32 %v1455, 1.442695
  %v1523 = vpow.pop %v1522
  %v1524 = vmul.f32 %v1456, 1.442695
  %v1525 = vpow.pop %v1524
  %v1526 = vmul.f32 %v1457, 1.442695
  %v1527 = vpow.pop %v1526
  %v1528 = vmul.f32 %v1458, 1.442695
  %v1529 = vpow.pop %v1528
  %v1530 = vmul.f32 %v1459, 1.442695
  %v1531 = vpow.pop %v1530
  %v1532 = vmul.f32 %v1460, 1.442695
  %v1533 = vpow.pop %v1532
  %v1534 = vmul.f32 %v1461, 1.442695
  %v1535 = vpow.pop %v1534
  %v1536 = vmul.f32 %v1462, 1.442695
  %v1537 = vpow.pop %v1536
  %v1538 = vmul.f32 %v1463, 1.442695
  %v1539 = vpow.pop %v1538
  %v1540 = vmul.f32 %v1464, 1.442695
  %v1541 = vpow.pop %v1540
  %v1542 = vmul.f32 %v1465, 1.442695
  %v1543 = vpow.pop %v1542
  %v1544 = vmul.f32 %v1466, 1.442695
  %v1545 = vpow.pop %v1544
  %v1546 = vmul.f32 %v1467, 1.442695
  %v1547 = vpow.pop %v1546
  %v1548 = vmul.f32 %v1468, 1.442695
  %v1549 = vpow.pop %v1548
  %v1550 = vmul.f32 %v1469, 1.442695
  %v1551 = vpow.pop %v1550
  %v1552 = vmul.f32 %v1470, 1.442695
  %v1553 = vpow.pop %v1552
  %v1554 = vmul.f32 %v1471, 1.442695
  %v1555 = vpow.pop %v1554
  %v1556 = vmul.f32 %v1472, 1.442695
  %v1557 = vpow.pop %v1556
  %v1558 = vmul.f32 %v1473, 1.442695
  %v1559 = vpow.pop %v1558
  %v1560 = vmul.f32 %v1474, 1.442695
  %v1561 = vpow.pop %v1560
  %v1562 = vmul.f32 %v1475, 1.442695
  %v1563 = vpow.pop %v1562
  %v1564 = vmul.f32 %v1476, 1.442695
  %v1565 = vpow.pop %v1564
  %v1566 = vmul.f32 %v1477, 1.442695
  %v1567 = vpow.pop %v1566
  %v1568 = vmul.f32 %v1478, 1.442695
  %v1569 = vpow.pop %v1568
  %v1570 = vmul.f32 %v1479, 1.442695
  %v1571 = vpow.pop %v1570
  %v1572 = vmul.f32 %v1480, 1.442695
  %v1573 = vpow.pop %v1572
  %v1574 = vmul.f32 %v1481, 1.442695
  %v1575 = vpow.pop %v1574
  %v1576 = vmul.f32 %v1482, 1.442695
  %v1577 = vpow.pop %v1576
  %v1578 = vmul.f32 %v1483, 1.442695
  %v1579 = vpow.pop %v1578
  %v1580 = vmul.f32 %v1484, 1.442695
  %v1581 = vpow.pop %v1580
  %v1582 = vmul.f32 %v1485, 1.442695
  %v1583 = vpow.pop %v1582
  %v1584 = vmul.f32 %v1486, 1.442695
  %v1585 = vpow.pop %v1584
  %v1586 = vmul.f32 %v1487, 1.442695
  %v1587 = vpow.pop %v1586
  %v1588 = vmul.f32 %v1488, 1.442695
  %v1589 = vpow.pop %v1588
  %v1590 = vmul.f32 %v1489, 1.442695
  %v1591 = vpow.pop %v1590
  %v1592 = vmul.f32 %v1490, 1.442695
  %v1593 = vpow.pop %v1592
  %v1594 = vmul.f32 %v1491, 1.442695
  %v1595 = vpow.pop %v1594
  %v1596 = vmul.f32 %v1492, 1.442695
  %v1597 = vpow.pop %v1596
  %v1598 = vmul.f32 %v1493, 1.442695
  %v1599 = vpow.pop %v1598
  %v1600 = vmul.f32 %v1494, 1.442695
  %v1601 = vpow.pop %v1600
  %v1602 = vmul.f32 %v1495, 1.442695
  %v1603 = vpow.pop %v1602
  %v1604 = vmul.f32 %v1496, 1.442695
  %v1605 = vpow.pop %v1604
  %v1606 = vmul.f32 %v1497, 1.442695
  %v1607 = vpow.pop %v1606
  %v1608 = vmul.f32 %v1498, 1.442695
  %v1609 = vpow.pop %v1608
  %v1610 = vmul.f32 %v1499, 1.442695
  %v1611 = vpow.pop %v1610
  %v1612 = vmul.f32 %v1500, 1.442695
  %v1613 = vpow.pop %v1612
  %v1614 = vmul.f32 %v1501, 1.442695
  %v1615 = vpow.pop %v1614
  %v1616 = vmul.f32 %v1502, 1.442695
  %v1617 = vpow.pop %v1616
  %v1618 = vmul.f32 %v1503, 1.442695
  %v1619 = vpow.pop %v1618
  %v1620 = vmul.f32 %v1504, 1.442695
  %v1621 = vpow.pop %v1620
  %v1622 = vmul.f32 %v1505, 1.442695
  %v1623 = vpow.pop %v1622
  %v1624 = vmul.f32 %v1506, 1.442695
  %v1625 = vpow.pop %v1624
  %v1626 = vmul.f32 %v1507, 1.442695
  %v1627 = vpow.pop %v1626
  %v1628 = vmul.f32 %v1508, 1.442695
  %v1629 = vpow.pop %v1628
  %v1630 = vmul.f32 %v1509, 1.442695
  %v1631 = vpow.pop %v1630
  %v1632 = vmul.f32 %v1510, 1.442695
  %v1633 = vpow.pop %v1632
  %v1634 = vmul.f32 %v1511, 1.442695
  %v1635 = vpow.pop %v1634
  %v1636 = vmul.f32 %v1512, 1.442695
  %v1637 = vpow.pop %v1636
  %v1638 = vmul.f32 %v1513, 1.442695
  %v1639 = vpow.pop %v1638
  %v1640 = vmul.f32 %v1514, 1.442695
  %v1641 = vpow.pop %v1640
  %v1642 = vmul.f32 %v1515, 1.442695
  %v1643 = vpow.pop %v1642
  %1644 = vadd.xlane.f32.xlu0 %v1517
  %v1645 = vpop.xlane.xlu0 %1644
  %1646 = vadd.xlane.f32.xlu0 %v1519
  %v1647 = vpop.xlane.xlu0 %1646
  %1648 = vadd.xlane.f32.xlu0 %v1521
  %v1649 = vpop.xlane.xlu0 %1648
  %1650 = vadd.xlane.f32.xlu0 %v1523
  %v1651 = vpop.xlane.xlu0 %1650
  %1652 = vadd.xlane.f32.xlu0 %v1525
  %v1653 = vpop.xlane.xlu0 %1652
  %1654 = vadd.xlane.f32.xlu0 %v1527
  %v1655 = vpop.xlane.xlu0 %1654
  %1656 = vadd.xlane.f32.xlu0 %v1529
  %v1657 = vpop.xlane.xlu0 %1656
  %1658 = vadd.xlane.f32.xlu0 %v1531
  %v1659 = vpop.xlane.xlu0 %1658
  %1660 = vadd.xlane.f32.xlu0 %v1533
  %v1661 = vpop.xlane.xlu0 %1660
  %1662 = vadd.xlane.f32.xlu0 %v1535
  %v1663 = vpop.xlane.xlu0 %1662
  %1664 = vadd.xlane.f32.xlu0 %v1537
  %v1665 = vpop.xlane.xlu0 %1664
  %1666 = vadd.xlane.f32.xlu0 %v1539
  %v1667 = vpop.xlane.xlu0 %1666
  %1668 = vadd.xlane.f32.xlu0 %v1541
  %v1669 = vpop.xlane.xlu0 %1668
  %1670 = vadd.xlane.f32.xlu0 %v1543
  %v1671 = vpop.xlane.xlu0 %1670
  %1672 = vadd.xlane.f32.xlu0 %v1545
  %v1673 = vpop.xlane.xlu0 %1672
  %1674 = vadd.xlane.f32.xlu0 %v1547
  %v1675 = vpop.xlane.xlu0 %1674
  %1676 = vadd.xlane.f32.xlu0 %v1549
  %v1677 = vpop.xlane.xlu0 %1676
  %1678 = vadd.xlane.f32.xlu0 %v1551
  %v1679 = vpop.xlane.xlu0 %1678
  %1680 = vadd.xlane.f32.xlu0 %v1553
  %v1681 = vpop.xlane.xlu0 %1680
  %1682 = vadd.xlane.f32.xlu0 %v1555
  %v1683 = vpop.xlane.xlu0 %1682
  %1684 = vadd.xlane.f32.xlu0 %v1557
  %v1685 = vpop.xlane.xlu0 %1684
  %1686 = vadd.xlane.f32.xlu0 %v1559
  %v1687 = vpop.xlane.xlu0 %1686
  %1688 = vadd.xlane.f32.xlu0 %v1561
  %v1689 = vpop.xlane.xlu0 %1688
  %1690 = vadd.xlane.f32.xlu0 %v1563
  %v1691 = vpop.xlane.xlu0 %1690
  %1692 = vadd.xlane.f32.xlu0 %v1565
  %v1693 = vpop.xlane.xlu0 %1692
  %1694 = vadd.xlane.f32.xlu0 %v1567
  %v1695 = vpop.xlane.xlu0 %1694
  %1696 = vadd.xlane.f32.xlu0 %v1569
  %v1697 = vpop.xlane.xlu0 %1696
  %1698 = vadd.xlane.f32.xlu0 %v1571
  %v1699 = vpop.xlane.xlu0 %1698
  %1700 = vadd.xlane.f32.xlu0 %v1573
  %v1701 = vpop.xlane.xlu0 %1700
  %1702 = vadd.xlane.f32.xlu0 %v1575
  %v1703 = vpop.xlane.xlu0 %1702
  %1704 = vadd.xlane.f32.xlu0 %v1577
  %v1705 = vpop.xlane.xlu0 %1704
  %1706 = vadd.xlane.f32.xlu0 %v1579
  %v1707 = vpop.xlane.xlu0 %1706
  %1708 = vadd.xlane.f32.xlu0 %v1581
  %v1709 = vpop.xlane.xlu0 %1708
  %1710 = vadd.xlane.f32.xlu0 %v1583
  %v1711 = vpop.xlane.xlu0 %1710
  %1712 = vadd.xlane.f32.xlu0 %v1585
  %v1713 = vpop.xlane.xlu0 %1712
  %1714 = vadd.xlane.f32.xlu0 %v1587
  %v1715 = vpop.xlane.xlu0 %1714
  %1716 = vadd.xlane.f32.xlu0 %v1589
  %v1717 = vpop.xlane.xlu0 %1716
  %1718 = vadd.xlane.f32.xlu0 %v1591
  %v1719 = vpop.xlane.xlu0 %1718
  %1720 = vadd.xlane.f32.xlu0 %v1593
  %v1721 = vpop.xlane.xlu0 %1720
  %1722 = vadd.xlane.f32.xlu0 %v1595
  %v1723 = vpop.xlane.xlu0 %1722
  %1724 = vadd.xlane.f32.xlu0 %v1597
  %v1725 = vpop.xlane.xlu0 %1724
  %1726 = vadd.xlane.f32.xlu0 %v1599
  %v1727 = vpop.xlane.xlu0 %1726
  %1728 = vadd.xlane.f32.xlu0 %v1601
  %v1729 = vpop.xlane.xlu0 %1728
  %1730 = vadd.xlane.f32.xlu0 %v1603
  %v1731 = vpop.xlane.xlu0 %1730
  %1732 = vadd.xlane.f32.xlu0 %v1605
  %v1733 = vpop.xlane.xlu0 %1732
  %1734 = vadd.xlane.f32.xlu0 %v1607
  %v1735 = vpop.xlane.xlu0 %1734
  %1736 = vadd.xlane.f32.xlu0 %v1609
  %v1737 = vpop.xlane.xlu0 %1736
  %1738 = vadd.xlane.f32.xlu0 %v1611
  %v1739 = vpop.xlane.xlu0 %1738
  %1740 = vadd.xlane.f32.xlu0 %v1613
  %v1741 = vpop.xlane.xlu0 %1740
  %1742 = vadd.xlane.f32.xlu0 %v1615
  %v1743 = vpop.xlane.xlu0 %1742
  %1744 = vadd.xlane.f32.xlu0 %v1617
  %v1745 = vpop.xlane.xlu0 %1744
  %1746 = vadd.xlane.f32.xlu0 %v1619
  %v1747 = vpop.xlane.xlu0 %1746
  %1748 = vadd.xlane.f32.xlu0 %v1621
  %v1749 = vpop.xlane.xlu0 %1748
  %1750 = vadd.xlane.f32.xlu0 %v1623
  %v1751 = vpop.xlane.xlu0 %1750
  %1752 = vadd.xlane.f32.xlu0 %v1625
  %v1753 = vpop.xlane.xlu0 %1752
  %1754 = vadd.xlane.f32.xlu0 %v1627
  %v1755 = vpop.xlane.xlu0 %1754
  %1756 = vadd.xlane.f32.xlu0 %v1629
  %v1757 = vpop.xlane.xlu0 %1756
  %1758 = vadd.xlane.f32.xlu0 %v1631
  %v1759 = vpop.xlane.xlu0 %1758
  %1760 = vadd.xlane.f32.xlu0 %v1633
  %v1761 = vpop.xlane.xlu0 %1760
  %1762 = vadd.xlane.f32.xlu0 %v1635
  %v1763 = vpop.xlane.xlu0 %1762
  %1764 = vadd.xlane.f32.xlu0 %v1637
  %v1765 = vpop.xlane.xlu0 %1764
  %1766 = vadd.xlane.f32.xlu0 %v1639
  %v1767 = vpop.xlane.xlu0 %1766
  %1768 = vadd.xlane.f32.xlu0 %v1641
  %v1769 = vpop.xlane.xlu0 %1768
  %1770 = vadd.xlane.f32.xlu0 %v1643
  %v1771 = vpop.xlane.xlu0 %1770
  %v1772 = vrcp.pop %v1645
  %v1773 = vrcp.pop %v1647
  %v1774 = vrcp.pop %v1649
  %v1775 = vrcp.pop %v1651
  %v1776 = vrcp.pop %v1653
  %v1777 = vrcp.pop %v1655
  %v1778 = vrcp.pop %v1657
  %v1779 = vrcp.pop %v1659
  %v1780 = vrcp.pop %v1661
  %v1781 = vrcp.pop %v1663
  %v1782 = vrcp.pop %v1665
  %v1783 = vrcp.pop %v1667
  %v1784 = vrcp.pop %v1669
  %v1785 = vrcp.pop %v1671
  %v1786 = vrcp.pop %v1673
  %v1787 = vrcp.pop %v1675
  %v1788 = vrcp.pop %v1677
  %v1789 = vrcp.pop %v1679
  %v1790 = vrcp.pop %v1681
  %v1791 = vrcp.pop %v1683
  %v1792 = vrcp.pop %v1685
  %v1793 = vrcp.pop %v1687
  %v1794 = vrcp.pop %v1689
  %v1795 = vrcp.pop %v1691
  %v1796 = vrcp.pop %v1693
  %v1797 = vrcp.pop %v1695
  %v1798 = vrcp.pop %v1697
  %v1799 = vrcp.pop %v1699
  %v1800 = vrcp.pop %v1701
  %v1801 = vrcp.pop %v1703
  %v1802 = vrcp.pop %v1705
  %v1803 = vrcp.pop %v1707
  %v1804 = vrcp.pop %v1709
  %v1805 = vrcp.pop %v1711
  %v1806 = vrcp.pop %v1713
  %v1807 = vrcp.pop %v1715
  %v1808 = vrcp.pop %v1717
  %v1809 = vrcp.pop %v1719
  %v1810 = vrcp.pop %v1721
  %v1811 = vrcp.pop %v1723
  %v1812 = vrcp.pop %v1725
  %v1813 = vrcp.pop %v1727
  %v1814 = vrcp.pop %v1729
  %v1815 = vrcp.pop %v1731
  %v1816 = vrcp.pop %v1733
  %v1817 = vrcp.pop %v1735
  %v1818 = vrcp.pop %v1737
  %v1819 = vrcp.pop %v1739
  %v1820 = vrcp.pop %v1741
  %v1821 = vrcp.pop %v1743
  %v1822 = vrcp.pop %v1745
  %v1823 = vrcp.pop %v1747
  %v1824 = vrcp.pop %v1749
  %v1825 = vrcp.pop %v1751
  %v1826 = vrcp.pop %v1753
  %v1827 = vrcp.pop %v1755
  %v1828 = vrcp.pop %v1757
  %v1829 = vrcp.pop %v1759
  %v1830 = vrcp.pop %v1761
  %v1831 = vrcp.pop %v1763
  %v1832 = vrcp.pop %v1765
  %v1833 = vrcp.pop %v1767
  %v1834 = vrcp.pop %v1769
  %v1835 = vrcp.pop %v1771
  %v1836 = vmul.f32 %v1645, %v1772
  %v1837 = vmul.f32 %v1647, %v1773
  %v1838 = vmul.f32 %v1649, %v1774
  %v1839 = vmul.f32 %v1651, %v1775
  %v1840 = vmul.f32 %v1653, %v1776
  %v1841 = vmul.f32 %v1655, %v1777
  %v1842 = vmul.f32 %v1657, %v1778
  %v1843 = vmul.f32 %v1659, %v1779
  %v1844 = vmul.f32 %v1661, %v1780
  %v1845 = vmul.f32 %v1663, %v1781
  %v1846 = vmul.f32 %v1665, %v1782
  %v1847 = vmul.f32 %v1667, %v1783
  %v1848 = vmul.f32 %v1669, %v1784
  %v1849 = vmul.f32 %v1671, %v1785
  %v1850 = vmul.f32 %v1673, %v1786
  %v1851 = vmul.f32 %v1675, %v1787
  %v1852 = vmul.f32 %v1677, %v1788
  %v1853 = vmul.f32 %v1679, %v1789
  %v1854 = vmul.f32 %v1681, %v1790
  %v1855 = vmul.f32 %v1683, %v1791
  %v1856 = vmul.f32 %v1685, %v1792
  %v1857 = vmul.f32 %v1687, %v1793
  %v1858 = vmul.f32 %v1689, %v1794
  %v1859 = vmul.f32 %v1691, %v1795
  %v1860 = vmul.f32 %v1693, %v1796
  %v1861 = vmul.f32 %v1695, %v1797
  %v1862 = vmul.f32 %v1697, %v1798
  %v1863 = vmul.f32 %v1699, %v1799
  %v1864 = vmul.f32 %v1701, %v1800
  %v1865 = vmul.f32 %v1703, %v1801
  %v1866 = vmul.f32 %v1705, %v1802
  %v1867 = vmul.f32 %v1707, %v1803
  %v1868 = vmul.f32 %v1709, %v1804
  %v1869 = vmul.f32 %v1711, %v1805
  %v1870 = vmul.f32 %v1713, %v1806
  %v1871 = vmul.f32 %v1715, %v1807
  %v1872 = vmul.f32 %v1717, %v1808
  %v1873 = vmul.f32 %v1719, %v1809
  %v1874 = vmul.f32 %v1721, %v1810
  %v1875 = vmul.f32 %v1723, %v1811
  %v1876 = vmul.f32 %v1725, %v1812
  %v1877 = vmul.f32 %v1727, %v1813
  %v1878 = vmul.f32 %v1729, %v1814
  %v1879 = vmul.f32 %v1731, %v1815
  %v1880 = vmul.f32 %v1733, %v1816
  %v1881 = vmul.f32 %v1735, %v1817
  %v1882 = vmul.f32 %v1737, %v1818
  %v1883 = vmul.f32 %v1739, %v1819
  %v1884 = vmul.f32 %v1741, %v1820
  %v1885 = vmul.f32 %v1743, %v1821
  %v1886 = vmul.f32 %v1745, %v1822
  %v1887 = vmul.f32 %v1747, %v1823
  %v1888 = vmul.f32 %v1749, %v1824
  %v1889 = vmul.f32 %v1751, %v1825
  %v1890 = vmul.f32 %v1753, %v1826
  %v1891 = vmul.f32 %v1755, %v1827
  %v1892 = vmul.f32 %v1757, %v1828
  %v1893 = vmul.f32 %v1759, %v1829
  %v1894 = vmul.f32 %v1761, %v1830
  %v1895 = vmul.f32 %v1763, %v1831
  %v1896 = vmul.f32 %v1765, %v1832
  %v1897 = vmul.f32 %v1767, %v1833
  %v1898 = vmul.f32 %v1769, %v1834
  %v1899 = vmul.f32 %v1771, %v1835
  %v1900 = vsub.f32 2.0, %v1836
  %v1901 = vsub.f32 2.0, %v1837
  %v1902 = vsub.f32 2.0, %v1838
  %v1903 = vsub.f32 2.0, %v1839
  %v1904 = vsub.f32 2.0, %v1840
  %v1905 = vsub.f32 2.0, %v1841
  %v1906 = vsub.f32 2.0, %v1842
  %v1907 = vsub.f32 2.0, %v1843
  %v1908 = vsub.f32 2.0, %v1844
  %v1909 = vsub.f32 2.0, %v1845
  %v1910 = vsub.f32 2.0, %v1846
  %v1911 = vsub.f32 2.0, %v1847
  %v1912 = vsub.f32 2.0, %v1848
  %v1913 = vsub.f32 2.0, %v1849
  %v1914 = vsub.f32 2.0, %v1850
  %v1915 = vsub.f32 2.0, %v1851
  %v1916 = vsub.f32 2.0, %v1852
  %v1917 = vsub.f32 2.0, %v1853
  %v1918 = vsub.f32 2.0, %v1854
  %v1919 = vsub.f32 2.0, %v1855
  %v1920 = vsub.f32 2.0, %v1856
  %v1921 = vsub.f32 2.0, %v1857
  %v1922 = vsub.f32 2.0, %v1858
  %v1923 = vsub.f32 2.0, %v1859
  %v1924 = vsub.f32 2.0, %v1860
  %v1925 = vsub.f32 2.0, %v1861
  %v1926 = vsub.f32 2.0, %v1862
  %v1927 = vsub.f32 2.0, %v1863
  %v1928 = vsub.f32 2.0, %v1864
  %v1929 = vsub.f32 2.0, %v1865
  %v1930 = vsub.f32 2.0, %v1866
  %v1931 = vsub.f32 2.0, %v1867
  %v1932 = vsub.f32 2.0, %v1868
  %v1933 = vsub.f32 2.0, %v1869
  %v1934 = vsub.f32 2.0, %v1870
  %v1935 = vsub.f32 2.0, %v1871
  %v1936 = vsub.f32 2.0, %v1872
  %v1937 = vsub.f32 2.0, %v1873
  %v1938 = vsub.f32 2.0, %v1874
  %v1939 = vsub.f32 2.0, %v1875
  %v1940 = vsub.f32 2.0, %v1876
  %v1941 = vsub.f32 2.0, %v1877
  %v1942 = vsub.f32 2.0, %v1878
  %v1943 = vsub.f32 2.0, %v1879
  %v1944 = vsub.f32 2.0, %v1880
  %v1945 = vsub.f32 2.0, %v1881
  %v1946 = vsub.f32 2.0, %v1882
  %v1947 = vsub.f32 2.0, %v1883
  %v1948 = vsub.f32 2.0, %v1884
  %v1949 = vsub.f32 2.0, %v1885
  %v1950 = vsub.f32 2.0, %v1886
  %v1951 = vsub.f32 2.0, %v1887
  %v1952 = vsub.f32 2.0, %v1888
  %v1953 = vsub.f32 2.0, %v1889
  %v1954 = vsub.f32 2.0, %v1890
  %v1955 = vsub.f32 2.0, %v1891
  %v1956 = vsub.f32 2.0, %v1892
  %v1957 = vsub.f32 2.0, %v1893
  %v1958 = vsub.f32 2.0, %v1894
  %v1959 = vsub.f32 2.0, %v1895
  %v1960 = vsub.f32 2.0, %v1896
  %v1961 = vsub.f32 2.0, %v1897
  %v1962 = vsub.f32 2.0, %v1898
  %v1963 = vsub.f32 2.0, %v1899
  %v1964 = vmul.f32 %v1772, %v1900
  %v1965 = vmul.f32 %v1773, %v1901
  %v1966 = vmul.f32 %v1774, %v1902
  %v1967 = vmul.f32 %v1775, %v1903
  %v1968 = vmul.f32 %v1776, %v1904
  %v1969 = vmul.f32 %v1777, %v1905
  %v1970 = vmul.f32 %v1778, %v1906
  %v1971 = vmul.f32 %v1779, %v1907
  %v1972 = vmul.f32 %v1780, %v1908
  %v1973 = vmul.f32 %v1781, %v1909
  %v1974 = vmul.f32 %v1782, %v1910
  %v1975 = vmul.f32 %v1783, %v1911
  %v1976 = vmul.f32 %v1784, %v1912
  %v1977 = vmul.f32 %v1785, %v1913
  %v1978 = vmul.f32 %v1786, %v1914
  %v1979 = vmul.f32 %v1787, %v1915
  %v1980 = vmul.f32 %v1788, %v1916
  %v1981 = vmul.f32 %v1789, %v1917
  %v1982 = vmul.f32 %v1790, %v1918
  %v1983 = vmul.f32 %v1791, %v1919
  %v1984 = vmul.f32 %v1792, %v1920
  %v1985 = vmul.f32 %v1793, %v1921
  %v1986 = vmul.f32 %v1794, %v1922
  %v1987 = vmul.f32 %v1795, %v1923
  %v1988 = vmul.f32 %v1796, %v1924
  %v1989 = vmul.f32 %v1797, %v1925
  %v1990 = vmul.f32 %v1798, %v1926
  %v1991 = vmul.f32 %v1799, %v1927
  %v1992 = vmul.f32 %v1800, %v1928
  %v1993 = vmul.f32 %v1801, %v1929
  %v1994 = vmul.f32 %v1802, %v1930
  %v1995 = vmul.f32 %v1803, %v1931
  %v1996 = vmul.f32 %v1804, %v1932
  %v1997 = vmul.f32 %v1805, %v1933
  %v1998 = vmul.f32 %v1806, %v1934
  %v1999 = vmul.f32 %v1807, %v1935
  %v2000 = vmul.f32 %v1808, %v1936
  %v2001 = vmul.f32 %v1809, %v1937
  %v2002 = vmul.f32 %v1810, %v1938
  %v2003 = vmul.f32 %v1811, %v1939
  %v2004 = vmul.f32 %v1812, %v1940
  %v2005 = vmul.f32 %v1813, %v1941
  %v2006 = vmul.f32 %v1814, %v1942
  %v2007 = vmul.f32 %v1815, %v1943
  %v2008 = vmul.f32 %v1816, %v1944
  %v2009 = vmul.f32 %v1817, %v1945
  %v2010 = vmul.f32 %v1818, %v1946
  %v2011 = vmul.f32 %v1819, %v1947
  %v2012 = vmul.f32 %v1820, %v1948
  %v2013 = vmul.f32 %v1821, %v1949
  %v2014 = vmul.f32 %v1822, %v1950
  %v2015 = vmul.f32 %v1823, %v1951
  %v2016 = vmul.f32 %v1824, %v1952
  %v2017 = vmul.f32 %v1825, %v1953
  %v2018 = vmul.f32 %v1826, %v1954
  %v2019 = vmul.f32 %v1827, %v1955
  %v2020 = vmul.f32 %v1828, %v1956
  %v2021 = vmul.f32 %v1829, %v1957
  %v2022 = vmul.f32 %v1830, %v1958
  %v2023 = vmul.f32 %v1831, %v1959
  %v2024 = vmul.f32 %v1832, %v1960
  %v2025 = vmul.f32 %v1833, %v1961
  %v2026 = vmul.f32 %v1834, %v1962
  %v2027 = vmul.f32 %v1835, %v1963
  %v2028 = vmul.f32 %v1517, %v1964
  %v2029 = vmul.f32 %v1519, %v1965
  %v2030 = vmul.f32 %v1521, %v1966
  %v2031 = vmul.f32 %v1523, %v1967
  %v2032 = vmul.f32 %v1525, %v1968
  %v2033 = vmul.f32 %v1527, %v1969
  %v2034 = vmul.f32 %v1529, %v1970
  %v2035 = vmul.f32 %v1531, %v1971
  %v2036 = vmul.f32 %v1533, %v1972
  %v2037 = vmul.f32 %v1535, %v1973
  %v2038 = vmul.f32 %v1537, %v1974
  %v2039 = vmul.f32 %v1539, %v1975
  %v2040 = vmul.f32 %v1541, %v1976
  %v2041 = vmul.f32 %v1543, %v1977
  %v2042 = vmul.f32 %v1545, %v1978
  %v2043 = vmul.f32 %v1547, %v1979
  %v2044 = vmul.f32 %v1549, %v1980
  %v2045 = vmul.f32 %v1551, %v1981
  %v2046 = vmul.f32 %v1553, %v1982
  %v2047 = vmul.f32 %v1555, %v1983
  %v2048 = vmul.f32 %v1557, %v1984
  %v2049 = vmul.f32 %v1559, %v1985
  %v2050 = vmul.f32 %v1561, %v1986
  %v2051 = vmul.f32 %v1563, %v1987
  %v2052 = vmul.f32 %v1565, %v1988
  %v2053 = vmul.f32 %v1567, %v1989
  %v2054 = vmul.f32 %v1569, %v1990
  %v2055 = vmul.f32 %v1571, %v1991
  %v2056 = vmul.f32 %v1573, %v1992
  %v2057 = vmul.f32 %v1575, %v1993
  %v2058 = vmul.f32 %v1577, %v1994
  %v2059 = vmul.f32 %v1579, %v1995
  %v2060 = vmul.f32 %v1581, %v1996
  %v2061 = vmul.f32 %v1583, %v1997
  %v2062 = vmul.f32 %v1585, %v1998
  %v2063 = vmul.f32 %v1587, %v1999
  %v2064 = vmul.f32 %v1589, %v2000
  %v2065 = vmul.f32 %v1591, %v2001
  %v2066 = vmul.f32 %v1593, %v2002
  %v2067 = vmul.f32 %v1595, %v2003
  %v2068 = vmul.f32 %v1597, %v2004
  %v2069 = vmul.f32 %v1599, %v2005
  %v2070 = vmul.f32 %v1601, %v2006
  %v2071 = vmul.f32 %v1603, %v2007
  %v2072 = vmul.f32 %v1605, %v2008
  %v2073 = vmul.f32 %v1607, %v2009
  %v2074 = vmul.f32 %v1609, %v2010
  %v2075 = vmul.f32 %v1611, %v2011
  %v2076 = vmul.f32 %v1613, %v2012
  %v2077 = vmul.f32 %v1615, %v2013
  %v2078 = vmul.f32 %v1617, %v2014
  %v2079 = vmul.f32 %v1619, %v2015
  %v2080 = vmul.f32 %v1621, %v2016
  %v2081 = vmul.f32 %v1623, %v2017
  %v2082 = vmul.f32 %v1625, %v2018
  %v2083 = vmul.f32 %v1627, %v2019
  %v2084 = vmul.f32 %v1629, %v2020
  %v2085 = vmul.f32 %v1631, %v2021
  %v2086 = vmul.f32 %v1633, %v2022
  %v2087 = vmul.f32 %v1635, %v2023
  %v2088 = vmul.f32 %v1637, %v2024
  %v2089 = vmul.f32 %v1639, %v2025
  %v2090 = vmul.f32 %v1641, %v2026
  %v2091 = vmul.f32 %v1643, %v2027
  %2092 = vst [vmem:[%s5] sm:$0xff] %v2028
  %2093 = vst [vmem:[%s5 + $0x8] sm:$0xff] %v2029
  %2094 = vst [vmem:[%s5 + $0x10] sm:$0xff] %v2030
  %2095 = vst [vmem:[%s5 + $0x18] sm:$0xff] %v2031
  %2096 = vst [vmem:[%s5 + $0x20] sm:$0xff] %v2032
  %2097 = vst [vmem:[%s5 + $0x28] sm:$0xff] %v2033
  %2098 = vst [vmem:[%s5 + $0x30] sm:$0xff] %v2034
  %2099 = vst [vmem:[%s5 + $0x38] sm:$0xff] %v2035
  %2100 = vst [vmem:[%s5 + $0x40] sm:$0xff] %v2036
  %2101 = vst [vmem:[%s5 + $0x48] sm:$0xff] %v2037
  %2102 = vst [vmem:[%s5 + $0x50] sm:$0xff] %v2038
  %2103 = vst [vmem:[%s5 + $0x58] sm:$0xff] %v2039
  %2104 = vst [vmem:[%s5 + $0x60] sm:$0xff] %v2040
  %2105 = vst [vmem:[%s5 + $0x68] sm:$0xff] %v2041
  %2106 = vst [vmem:[%s5 + $0x70] sm:$0xff] %v2042
  %2107 = vst [vmem:[%s5 + $0x78] sm:$0xff] %v2043
  %2108 = vst [vmem:[%s5 + $0x80] sm:$0xff] %v2044
  %2109 = vst [vmem:[%s5 + $0x88] sm:$0xff] %v2045
  %2110 = vst [vmem:[%s5 + $0x90] sm:$0xff] %v2046
  %2111 = vst [vmem:[%s5 + $0x98] sm:$0xff] %v2047
  %2112 = vst [vmem:[%s5 + $0xa0] sm:$0xff] %v2048
  %2113 = vst [vmem:[%s5 + $0xa8] sm:$0xff] %v2049
  %2114 = vst [vmem:[%s5 + $0xb0] sm:$0xff] %v2050
  %2115 = vst [vmem:[%s5 + $0xb8] sm:$0xff] %v2051
  %2116 = vst [vmem:[%s5 + $0xc0] sm:$0xff] %v2052
  %2117 = vst [vmem:[%s5 + $0xc8] sm:$0xff] %v2053
  %2118 = vst [vmem:[%s5 + $0xd0] sm:$0xff] %v2054
  %2119 = vst [vmem:[%s5 + $0xd8] sm:$0xff] %v2055
  %2120 = vst [vmem:[%s5 + $0xe0] sm:$0xff] %v2056
  %2121 = vst [vmem:[%s5 + $0xe8] sm:$0xff] %v2057
  %2122 = vst [vmem:[%s5 + $0xf0] sm:$0xff] %v2058
  %2123 = vst [vmem:[%s5 + $0xf8] sm:$0xff] %v2059
  %2124 = vst [vmem:[%s5 + $0x100] sm:$0xff] %v2060
  %2125 = vst [vmem:[%s5 + $0x108] sm:$0xff] %v2061
  %2126 = vst [vmem:[%s5 + $0x110] sm:$0xff] %v2062
  %2127 = vst [vmem:[%s5 + $0x118] sm:$0xff] %v2063
  %2128 = vst [vmem:[%s5 + $0x120] sm:$0xff] %v2064
  %2129 = vst [vmem:[%s5 + $0x128] sm:$0xff] %v2065
  %2130 = vst [vmem:[%s5 + $0x130] sm:$0xff] %v2066
  %2131 = vst [vmem:[%s5 + $0x138] sm:$0xff] %v2067
  %2132 = vst [vmem:[%s5 + $0x140] sm:$0xff] %v2068
  %2133 = vst [vmem:[%s5 + $0x148] sm:$0xff] %v2069
  %2134 = vst [vmem:[%s5 + $0x150] sm:$0xff] %v2070
  %2135 = vst [vmem:[%s5 + $0x158] sm:$0xff] %v2071
  %2136 = vst [vmem:[%s5 + $0x160] sm:$0xff] %v2072
  %2137 = vst [vmem:[%s5 + $0x168] sm:$0xff] %v2073
  %2138 = vst [vmem:[%s5 + $0x170] sm:$0xff] %v2074
  %2139 = vst [vmem:[%s5 + $0x178] sm:$0xff] %v2075
  %2140 = vst [vmem:[%s5 + $0x180] sm:$0xff] %v2076
  %2141 = vst [vmem:[%s5 + $0x188] sm:$0xff] %v2077
  %2142 = vst [vmem:[%s5 + $0x190] sm:$0xff] %v2078
  %2143 = vst [vmem:[%s5 + $0x198] sm:$0xff] %v2079
  %2144 = vst [vmem:[%s5 + $0x1a0] sm:$0xff] %v2080
  %2145 = vst [vmem:[%s5 + $0x1a8] sm:$0xff] %v2081
  %2146 = vst [vmem:[%s5 + $0x1b0] sm:$0xff] %v2082
  %2147 = vst [vmem:[%s5 + $0x1b8] sm:$0xff] %v2083
  %2148 = vst [vmem:[%s5 + $0x1c0] sm:$0xff] %v2084
  %2149 = vst [vmem:[%s5 + $0x1c8] sm:$0xff] %v2085
  %2150 = vst [vmem:[%s5 + $0x1d0] sm:$0xff] %v2086
  %2151 = vst [vmem:[%s5 + $0x1d8] sm:$0xff] %v2087
  %2152 = vst [vmem:[%s5 + $0x1e0] sm:$0xff] %v2088
  %2153 = vst [vmem:[%s5 + $0x1e8] sm:$0xff] %v2089
  %2154 = vst [vmem:[%s5 + $0x1f0] sm:$0xff] %v2090
  %2155 = vst [vmem:[%s5 + $0x1f8] sm:$0xff] %v2091
  // Predicated region
  $region22: #{policy_network.1} parent=0 // pred_check
    _
  $region23: #{policy_network.1} parent=0 // pred_check_branch
    %2157 = sbr.rel (0) target = $region25
  $region24: #{policy_network.1} parent=0 // pred_region
    _
  $region25: #{policy_network.1} parent=0 // pred_fallthru
    _
  // Predicated region
  $region26: #{policy_network.1} parent=0 // pred_check
    _
  $region27: #{policy_network.1} parent=0 // pred_check_branch
    %2159 = sbr.rel (0) target = $region29
  $region28: #{policy_network.1} parent=0 // pred_region
    _
  $region29: #{policy_network.1} parent=0 // pred_fallthru
    _

</llo_original>
